<compile_context>
chip_gen: v7x
topology: tpu7x:2x2x1
jax: 0.10.0
libtpu: 0.0.40
codegen_flags: <defaults>
</compile_context>

<pallas_src>
import functools

import numpy as np
import jax
import jax.numpy as jnp
from jax.experimental import pallas as pl
from jax.experimental.pallas import tpu as pltpu

LEAKY_SLOPE = 0.1
BN_EPS = 1e-5


def get_1dconv_params(input_size, output_size):
    """Stand-in for the repo-external `get_1Dconv_params` helper (source not provided).

    Returns conv-encoder params [(in_ch, out_ch, kernel, stride, pad), ...] mapping
    input_size=(C, L) down to output_size=(C, L) with kernel=4, stride=2, pad=1 halving
    stages and a geometric channel schedule.  DECONV1DN reverses this list.
    """
    # TODO(synk): replace with the original helper if the exact layer schedule must match.
    c_in, l_in = input_size
    c_out, l_out = output_size
    assert l_in >= l_out and l_in % l_out == 0
    ratio = l_in // l_out
    assert ratio & (ratio - 1) == 0, "length ratio must be a power of two"
    n = int(round(np.log2(ratio)))
    assert n >= 1
    chans = [int(round(c_in * (c_out / c_in) ** (i / n))) for i in range(n + 1)]
    chans[0], chans[-1] = c_in, c_out
    return [(chans[i], chans[i + 1], 4, 2, 1) for i in range(n)]


def make_deconv1dn(input_size, output_size, nonlinear=False, key=None):
    """Builds parameters mirroring DECONV1DN(..., batchnorm=True, dropout=False)."""
    e_p_list = list(reversed(get_1dconv_params(input_size, output_size)))
    layers = []
    keys = jax.random.split(key, 6 * len(e_p_list))
    for i, (ep0, ep1, k, s, p) in enumerate(e_p_list):
        in_ch, out_ch = ep1, ep0          # nn.ConvTranspose1d(e_p[1], e_p[0], ...)
        kk = keys[6 * i: 6 * i + 6]
        bound = 1.0 / np.sqrt(in_ch * k)
        layer = dict(
            w=jax.random.uniform(kk[0], (in_ch, out_ch, k), minval=-bound, maxval=bound,
                                 dtype=jnp.float32),
            b=jax.random.uniform(kk[1], (out_ch,), minval=-bound, maxval=bound,
                                 dtype=jnp.float32),
            kernel=k, stride=s, padding=p,
            apply_act=(i != len(e_p_list) - 1) or nonlinear,
        )
        if layer["apply_act"]:            # eval-mode BatchNorm1d parameters
            layer["bn_gamma"] = jax.random.uniform(kk[2], (out_ch,), minval=0.5, maxval=1.5,
                                                   dtype=jnp.float32)
            layer["bn_beta"] = jax.random.uniform(kk[3], (out_ch,), minval=-0.1, maxval=0.1,
                                                  dtype=jnp.float32)
            layer["bn_mean"] = 0.1 * jax.random.normal(kk[4], (out_ch,), dtype=jnp.float32)
            layer["bn_var"] = jax.random.uniform(kk[5], (out_ch,), minval=0.5, maxval=1.5,
                                                 dtype=jnp.float32)
        layers.append(layer)
    return layers


def _deconv1dn_kernel(x_ref, *refs, layer_cfgs, batch_block):
    """Fused decoder.  x_ref: [TB, L0, C0] bf16 block; refs = per-layer params + out_ref."""
    out_ref = refs[-1]
    param_refs = refs[:-1]

    for b in range(batch_block):                 # static unroll over the batch block
        h = x_ref[b]                             # [L, C] bf16, stays in registers
        pi = 0
        for li, (K, l_out, apply_act) in enumerate(layer_cfgs):
            s_ref = param_refs[pi]               # [L_pad, L_in]  bf16 0/1 upsample+pad op
            wf_ref = param_refs[pi + 1]          # [K, C_in, C_out] bf16 (tap-flipped)
            b_ref = param_refs[pi + 2]           # [1, C_out] f32
            pi += 3
            if apply_act:
                sc_ref = param_refs[pi]          # [1, C_out] f32 BN scale
                sh_ref = param_refs[pi + 1]      # [1, C_out] f32 BN shift
                pi += 2

            # Exact zero-insert upsample + implicit padding as a matmul (MXU, bf16 feed).
            h_pad = jnp.dot(s_ref[...], h,
                            preferred_element_type=jnp.float32).astype(jnp.bfloat16)

            # Transposed conv = sum over kernel taps of shifted-window channel matmuls.
            c_out = wf_ref.shape[2]
            acc = jnp.zeros((l_out, c_out), jnp.float32)
            for kk in range(K):
                acc = acc + jnp.dot(h_pad[kk:kk + l_out, :], wf_ref[kk],
                                    preferred_element_type=jnp.float32)
            y = acc + b_ref[...]

            if apply_act:                        # eval-mode BatchNorm + LeakyReLU(0.1)
                y = y * sc_ref[...] + sh_ref[...]
                y = jnp.where(y > 0, y, LEAKY_SLOPE * y)

            if li + 1 < len(layer_cfgs):
                h = y.astype(jnp.bfloat16)       # bf16 feed for the next layer's MXU
            else:
                out_ref[b] = y.astype(out_ref.dtype)


def deconv1dn_forward(x, layers, *, batch_tile=8):
    """x: [B, C, L] float32 (PyTorch Conv1d layout). Returns [B, C_out, L_out] float32."""
    B, c0, l0 = x.shape

    # Batch block: largest divisor of B not exceeding batch_tile (keeps BlockSpecs exact).
    tb = max(1, min(batch_tile, B))
    while B % tb:
        tb -= 1

    # Channels-last + bf16 feed for the kernel.
    x_cl = jnp.transpose(x, (0, 2, 1)).astype(jnp.bfloat16)     # [B, L, C]

    flat_params = []
    layer_cfgs = []
    l_in, c_in = l0, c0
    for layer in layers:
        w, k, s, p = layer["w"], layer["kernel"], layer["stride"], layer["padding"]
        assert w.shape[0] == c_in
        c_out = w.shape[1]
        pad = k - 1 - p
        assert pad >= 0, "padding > kernel-1 not supported"     # TODO(synk): negative pad
        l_up = (l_in - 1) * s + 1
        l_pad = l_up + 2 * pad
        l_out = (l_in - 1) * s - 2 * p + k

        # Exact 0/1 upsample+pad operator (rows: padded/upsampled positions).
        S = np.zeros((l_pad, l_in), np.float32)
        S[pad + np.arange(l_in) * s, np.arange(l_in)] = 1.0

        # Tap-flipped weights: Wf[kk] = W[:, :, K-1-kk], stored [K, C_in, C_out] in bf16.
        wf = jnp.transpose(jnp.flip(w, axis=2), (2, 0, 1)).astype(jnp.bfloat16)

        flat_params += [jnp.asarray(S, jnp.bfloat16), wf,
                        layer["b"].reshape(1, c_out).astype(jnp.float32)]
        if layer["apply_act"]:
            scale = layer["bn_gamma"] / jnp.sqrt(layer["bn_var"] + BN_EPS)
            shift = layer["bn_beta"] - layer["bn_mean"] * scale
            flat_params += [scale.reshape(1, c_out).astype(jnp.float32),
                            shift.reshape(1, c_out).astype(jnp.float32)]
        layer_cfgs.append((int(k), int(l_out), bool(layer["apply_act"])))
        l_in, c_in = l_out, c_out

    out_l, out_c = l_in, c_in

    def _const_spec(a):
        n = a.ndim
        return pl.BlockSpec(a.shape, lambda i, _n=n: (0,) * _n)   # resident, DMA'd once

    kernel = functools.partial(_deconv1dn_kernel,
                               layer_cfgs=tuple(layer_cfgs), batch_block=tb)

    out_cl = pl.pallas_call(
        kernel,
        out_shape=jax.ShapeDtypeStruct((B, out_l, out_c), jnp.float32),
        grid=(B // tb,),
        in_specs=[pl.BlockSpec((tb, l0, c0), lambda i: (i, 0, 0))]
                 + [_const_spec(a) for a in flat_params],
        out_specs=pl.BlockSpec((tb, out_l, out_c), lambda i: (i, 0, 0)),
        compiler_params=pltpu.CompilerParams(dimension_semantics=("parallel",)),
    )(x_cl, *flat_params)

    return jnp.transpose(out_cl, (0, 2, 1))      # back to [B, C_out, L_out]


def _reference_forward(x, layers):
    """Eval-mode DECONV1DN forward in float64 numpy (x / W rounded to bf16 to mirror the
    kernel's MXU feed; accumulation, bias, BN, LeakyReLU in high precision)."""
    def bf16(a):
        return np.asarray(jnp.asarray(a).astype(jnp.bfloat16).astype(jnp.float32))

    h = bf16(x).astype(np.float64)
    for layer in layers:
        w = bf16(layer["w"]).astype(np.float64)        # [C_in, C_out, K]
        bias = np.asarray(layer["b"], np.float64)
        k, s, p = layer["kernel"], layer["stride"], layer["padding"]
        bsz, _, l_in = h.shape
        c_out = w.shape[1]
        l_out = (l_in - 1) * s - 2 * p + k
        out = np.zeros((bsz, c_out, l_out), np.float64)
        for i in range(l_in):
            for kk in range(k):
                t = i * s + kk - p
                if 0 <= t < l_out:
                    out[:, :, t] += h[:, :, i] @ w[:, :, kk]
        out += bias[None, :, None]
        if layer["apply_act"]:
            scale = np.asarray(layer["bn_gamma"], np.float64) / np.sqrt(
                np.asarray(layer["bn_var"], np.float64) + BN_EPS)
            shift = np.asarray(layer["bn_beta"], np.float64) - \
                np.asarray(layer["bn_mean"], np.float64) * scale
            out = out * scale[None, :, None] + shift[None, :, None]
            out = np.where(out > 0.0, out, LEAKY_SLOPE * out)
        h = out
    return h.astype(np.float32)


if __name__ == "__main__":
    # Encoder spec: input_size=(C=8, L=16) -> output_size=(C=32, L=4).
    # DECONV1DN decodes back: [B, 32, 4] -> ConvT(32->16,k4,s2,p1)+BN+LeakyReLU
    #                                   -> ConvT(16->8, k4,s2,p1)            -> [B, 8, 16]
    batch = 4
    input_size = (8, 16)
    output_size = (32, 4)

    key = jax.random.PRNGKey(0)
    k_x, k_p = jax.random.split(key)
    layers = make_deconv1dn(input_size, output_size, nonlinear=False, key=k_p)

    dec_in_ch, dec_in_len = output_size
    x = jax.random.normal(k_x, (batch, dec_in_ch, dec_in_len), dtype=jnp.float32)

    out = deconv1dn_forward(x, layers, batch_tile=2)   # grid=(2,), parallel over batch
    out = jax.block_until_ready(out)

    ref = _reference_forward(np.asarray(x), layers)
    assert out.shape == ref.shape == (batch, input_size[0], input_size[1])
    # bf16 MXU feed (f32 accumulation) => relaxed tolerance vs the f64 reference.
    np.testing.assert_allclose(np.asarray(out), ref, atol=3e-2, rtol=3e-2)

    print("KERNEL_OK")
</pallas_src>

<mosaic_0001>
module attributes {stable_mosaic.version = 11 : i64} {
  func.func @_deconv1dn_kernel(%arg0: i32, %arg1: memref<2x4x32xbf16, #tpu.memory_space<vmem>>, %arg2: memref<11x4xbf16, #tpu.memory_space<vmem>>, %arg3: memref<4x32x16xbf16, #tpu.memory_space<vmem>>, %arg4: memref<1x16xf32, #tpu.memory_space<vmem>>, %arg5: memref<1x16xf32, #tpu.memory_space<vmem>>, %arg6: memref<1x16xf32, #tpu.memory_space<vmem>>, %arg7: memref<19x8xbf16, #tpu.memory_space<vmem>>, %arg8: memref<4x16x8xbf16, #tpu.memory_space<vmem>>, %arg9: memref<1x8xf32, #tpu.memory_space<vmem>>, %arg10: memref<2x16x8xf32, #tpu.memory_space<vmem>>) attributes {dimension_semantics = [#tpu.dimension_semantics<parallel>], iteration_bounds = array<i64: 2>, scalar_prefetch = 0 : i64, scratch_operands = 0 : i64, tpu.core_type = #tpu.core_type<tc>, window_params = [{transform_indices = @transform_0, window_bounds = array<i64: 2, 4, 32>}, {pipeline_mode = #tpu.pipeline_mode<synchronous>, transform_indices = @transform_1, window_bounds = array<i64: 11, 4>}, {pipeline_mode = #tpu.pipeline_mode<synchronous>, transform_indices = @transform_2, window_bounds = array<i64: 4, 32, 16>}, {pipeline_mode = #tpu.pipeline_mode<synchronous>, transform_indices = @transform_3, window_bounds = array<i64: 1, 16>}, {pipeline_mode = #tpu.pipeline_mode<synchronous>, transform_indices = @transform_4, window_bounds = array<i64: 1, 16>}, {pipeline_mode = #tpu.pipeline_mode<synchronous>, transform_indices = @transform_5, window_bounds = array<i64: 1, 16>}, {pipeline_mode = #tpu.pipeline_mode<synchronous>, transform_indices = @transform_6, window_bounds = array<i64: 19, 8>}, {pipeline_mode = #tpu.pipeline_mode<synchronous>, transform_indices = @transform_7, window_bounds = array<i64: 4, 16, 8>}, {pipeline_mode = #tpu.pipeline_mode<synchronous>, transform_indices = @transform_8, window_bounds = array<i64: 1, 8>}, {transform_indices = @transform_9, window_bounds = array<i64: 2, 16, 8>}]} {
    %c0 = arith.constant 0 : index
    %c0_0 = arith.constant 0 : index
    %c0_1 = arith.constant 0 : index
    %0 = vector.load %arg1[%c0, %c0_0, %c0_1] : memref<2x4x32xbf16, #tpu.memory_space<vmem>>, vector<1x4x32xbf16>
    %1 = vector.shape_cast %0 : vector<1x4x32xbf16> to vector<4x32xbf16>
    %c0_2 = arith.constant 0 : index
    %c0_3 = arith.constant 0 : index
    %2 = vector.load %arg2[%c0_2, %c0_3] : memref<11x4xbf16, #tpu.memory_space<vmem>>, vector<11x4xbf16>
    %cst = arith.constant dense<0.000000e+00> : vector<11x32xf32>
    %3 = tpu.matmul %2, %1, %cst {dimension_numbers = #tpu.dot_dimension_numbers<[1], [0], [0], [1], [0, 0, 1, 1], [], []>} : vector<11x4xbf16>, vector<4x32xbf16>, vector<11x32xf32> -> vector<11x32xf32>
    %4 = arith.truncf %3 : vector<11x32xf32> to vector<11x32xbf16>
    %cst_4 = arith.constant 0.000000e+00 : f32
    %5 = vector.broadcast %cst_4 : f32 to vector<8x16xf32>
    %6 = vector.extract_strided_slice %4 {offsets = [0, 0], sizes = [8, 32], strides = [1, 1]} : vector<11x32xbf16> to vector<8x32xbf16>
    %c0_5 = arith.constant 0 : index
    %c0_6 = arith.constant 0 : index
    %c0_7 = arith.constant 0 : index
    %7 = vector.load %arg3[%c0_5, %c0_6, %c0_7] : memref<4x32x16xbf16, #tpu.memory_space<vmem>>, vector<1x32x16xbf16>
    %8 = vector.shape_cast %7 : vector<1x32x16xbf16> to vector<32x16xbf16>
    %cst_8 = arith.constant dense<0.000000e+00> : vector<8x16xf32>
    %9 = tpu.matmul %6, %8, %cst_8 {dimension_numbers = #tpu.dot_dimension_numbers<[1], [0], [0], [1], [0, 0, 1, 1], [], []>} : vector<8x32xbf16>, vector<32x16xbf16>, vector<8x16xf32> -> vector<8x16xf32>
    %10 = arith.addf %5, %9 : vector<8x16xf32>
    %11 = vector.extract_strided_slice %4 {offsets = [1, 0], sizes = [8, 32], strides = [1, 1]} : vector<11x32xbf16> to vector<8x32xbf16>
    %c1 = arith.constant 1 : index
    %c0_9 = arith.constant 0 : index
    %c0_10 = arith.constant 0 : index
    %12 = vector.load %arg3[%c1, %c0_9, %c0_10] : memref<4x32x16xbf16, #tpu.memory_space<vmem>>, vector<1x32x16xbf16>
    %13 = vector.shape_cast %12 : vector<1x32x16xbf16> to vector<32x16xbf16>
    %cst_11 = arith.constant dense<0.000000e+00> : vector<8x16xf32>
    %14 = tpu.matmul %11, %13, %cst_11 {dimension_numbers = #tpu.dot_dimension_numbers<[1], [0], [0], [1], [0, 0, 1, 1], [], []>} : vector<8x32xbf16>, vector<32x16xbf16>, vector<8x16xf32> -> vector<8x16xf32>
    %15 = arith.addf %10, %14 : vector<8x16xf32>
    %16 = vector.extract_strided_slice %4 {offsets = [2, 0], sizes = [8, 32], strides = [1, 1]} : vector<11x32xbf16> to vector<8x32xbf16>
    %c2 = arith.constant 2 : index
    %c0_12 = arith.constant 0 : index
    %c0_13 = arith.constant 0 : index
    %17 = vector.load %arg3[%c2, %c0_12, %c0_13] : memref<4x32x16xbf16, #tpu.memory_space<vmem>>, vector<1x32x16xbf16>
    %18 = vector.shape_cast %17 : vector<1x32x16xbf16> to vector<32x16xbf16>
    %cst_14 = arith.constant dense<0.000000e+00> : vector<8x16xf32>
    %19 = tpu.matmul %16, %18, %cst_14 {dimension_numbers = #tpu.dot_dimension_numbers<[1], [0], [0], [1], [0, 0, 1, 1], [], []>} : vector<8x32xbf16>, vector<32x16xbf16>, vector<8x16xf32> -> vector<8x16xf32>
    %20 = arith.addf %15, %19 : vector<8x16xf32>
    %21 = vector.extract_strided_slice %4 {offsets = [3, 0], sizes = [8, 32], strides = [1, 1]} : vector<11x32xbf16> to vector<8x32xbf16>
    %c3 = arith.constant 3 : index
    %c0_15 = arith.constant 0 : index
    %c0_16 = arith.constant 0 : index
    %22 = vector.load %arg3[%c3, %c0_15, %c0_16] : memref<4x32x16xbf16, #tpu.memory_space<vmem>>, vector<1x32x16xbf16>
    %23 = vector.shape_cast %22 : vector<1x32x16xbf16> to vector<32x16xbf16>
    %cst_17 = arith.constant dense<0.000000e+00> : vector<8x16xf32>
    %24 = tpu.matmul %21, %23, %cst_17 {dimension_numbers = #tpu.dot_dimension_numbers<[1], [0], [0], [1], [0, 0, 1, 1], [], []>} : vector<8x32xbf16>, vector<32x16xbf16>, vector<8x16xf32> -> vector<8x16xf32>
    %25 = arith.addf %20, %24 : vector<8x16xf32>
    %c0_18 = arith.constant 0 : index
    %c0_19 = arith.constant 0 : index
    %26 = vector.load %arg4[%c0_18, %c0_19] : memref<1x16xf32, #tpu.memory_space<vmem>>, vector<1x16xf32>
    %27 = vector.broadcast %26 : vector<1x16xf32> to vector<8x16xf32>
    %28 = arith.addf %25, %27 : vector<8x16xf32>
    %c0_20 = arith.constant 0 : index
    %c0_21 = arith.constant 0 : index
    %29 = vector.load %arg5[%c0_20, %c0_21] : memref<1x16xf32, #tpu.memory_space<vmem>>, vector<1x16xf32>
    %30 = vector.broadcast %29 : vector<1x16xf32> to vector<8x16xf32>
    %31 = arith.mulf %28, %30 : vector<8x16xf32>
    %c0_22 = arith.constant 0 : index
    %c0_23 = arith.constant 0 : index
    %32 = vector.load %arg6[%c0_22, %c0_23] : memref<1x16xf32, #tpu.memory_space<vmem>>, vector<1x16xf32>
    %33 = vector.broadcast %32 : vector<1x16xf32> to vector<8x16xf32>
    %34 = arith.addf %31, %33 : vector<8x16xf32>
    %cst_24 = arith.constant 0.000000e+00 : f32
    %35 = vector.broadcast %cst_24 : f32 to vector<8x16xf32>
    %36 = arith.cmpf ogt, %34, %35 : vector<8x16xf32>
    %cst_25 = arith.constant 1.000000e-01 : f32
    %37 = vector.broadcast %cst_25 : f32 to vector<8x16xf32>
    %38 = arith.mulf %37, %34 : vector<8x16xf32>
    %39 = arith.select %36, %34, %38 : vector<8x16xi1>, vector<8x16xf32>
    %40 = arith.truncf %39 : vector<8x16xf32> to vector<8x16xbf16>
    %c0_26 = arith.constant 0 : index
    %c0_27 = arith.constant 0 : index
    %41 = vector.load %arg7[%c0_26, %c0_27] : memref<19x8xbf16, #tpu.memory_space<vmem>>, vector<19x8xbf16>
    %cst_28 = arith.constant dense<0.000000e+00> : vector<19x16xf32>
    %42 = tpu.matmul %41, %40, %cst_28 {dimension_numbers = #tpu.dot_dimension_numbers<[1], [0], [0], [1], [0, 0, 1, 1], [], []>} : vector<19x8xbf16>, vector<8x16xbf16>, vector<19x16xf32> -> vector<19x16xf32>
    %43 = arith.truncf %42 : vector<19x16xf32> to vector<19x16xbf16>
    %cst_29 = arith.constant 0.000000e+00 : f32
    %44 = vector.broadcast %cst_29 : f32 to vector<16x8xf32>
    %45 = vector.extract_strided_slice %43 {offsets = [0, 0], sizes = [16, 16], strides = [1, 1]} : vector<19x16xbf16> to vector<16x16xbf16>
    %c0_30 = arith.constant 0 : index
    %c0_31 = arith.constant 0 : index
    %c0_32 = arith.constant 0 : index
    %46 = vector.load %arg8[%c0_30, %c0_31, %c0_32] : memref<4x16x8xbf16, #tpu.memory_space<vmem>>, vector<1x16x8xbf16>
    %47 = vector.shape_cast %46 : vector<1x16x8xbf16> to vector<16x8xbf16>
    %cst_33 = arith.constant dense<0.000000e+00> : vector<16x8xf32>
    %48 = tpu.matmul %45, %47, %cst_33 {dimension_numbers = #tpu.dot_dimension_numbers<[1], [0], [0], [1], [0, 0, 1, 1], [], []>} : vector<16x16xbf16>, vector<16x8xbf16>, vector<16x8xf32> -> vector<16x8xf32>
    %49 = arith.addf %44, %48 : vector<16x8xf32>
    %50 = vector.extract_strided_slice %43 {offsets = [1, 0], sizes = [16, 16], strides = [1, 1]} : vector<19x16xbf16> to vector<16x16xbf16>
    %c1_34 = arith.constant 1 : index
    %c0_35 = arith.constant 0 : index
    %c0_36 = arith.constant 0 : index
    %51 = vector.load %arg8[%c1_34, %c0_35, %c0_36] : memref<4x16x8xbf16, #tpu.memory_space<vmem>>, vector<1x16x8xbf16>
    %52 = vector.shape_cast %51 : vector<1x16x8xbf16> to vector<16x8xbf16>
    %cst_37 = arith.constant dense<0.000000e+00> : vector<16x8xf32>
    %53 = tpu.matmul %50, %52, %cst_37 {dimension_numbers = #tpu.dot_dimension_numbers<[1], [0], [0], [1], [0, 0, 1, 1], [], []>} : vector<16x16xbf16>, vector<16x8xbf16>, vector<16x8xf32> -> vector<16x8xf32>
    %54 = arith.addf %49, %53 : vector<16x8xf32>
    %55 = vector.extract_strided_slice %43 {offsets = [2, 0], sizes = [16, 16], strides = [1, 1]} : vector<19x16xbf16> to vector<16x16xbf16>
    %c2_38 = arith.constant 2 : index
    %c0_39 = arith.constant 0 : index
    %c0_40 = arith.constant 0 : index
    %56 = vector.load %arg8[%c2_38, %c0_39, %c0_40] : memref<4x16x8xbf16, #tpu.memory_space<vmem>>, vector<1x16x8xbf16>
    %57 = vector.shape_cast %56 : vector<1x16x8xbf16> to vector<16x8xbf16>
    %cst_41 = arith.constant dense<0.000000e+00> : vector<16x8xf32>
    %58 = tpu.matmul %55, %57, %cst_41 {dimension_numbers = #tpu.dot_dimension_numbers<[1], [0], [0], [1], [0, 0, 1, 1], [], []>} : vector<16x16xbf16>, vector<16x8xbf16>, vector<16x8xf32> -> vector<16x8xf32>
    %59 = arith.addf %54, %58 : vector<16x8xf32>
    %60 = vector.extract_strided_slice %43 {offsets = [3, 0], sizes = [16, 16], strides = [1, 1]} : vector<19x16xbf16> to vector<16x16xbf16>
    %c3_42 = arith.constant 3 : index
    %c0_43 = arith.constant 0 : index
    %c0_44 = arith.constant 0 : index
    %61 = vector.load %arg8[%c3_42, %c0_43, %c0_44] : memref<4x16x8xbf16, #tpu.memory_space<vmem>>, vector<1x16x8xbf16>
    %62 = vector.shape_cast %61 : vector<1x16x8xbf16> to vector<16x8xbf16>
    %cst_45 = arith.constant dense<0.000000e+00> : vector<16x8xf32>
    %63 = tpu.matmul %60, %62, %cst_45 {dimension_numbers = #tpu.dot_dimension_numbers<[1], [0], [0], [1], [0, 0, 1, 1], [], []>} : vector<16x16xbf16>, vector<16x8xbf16>, vector<16x8xf32> -> vector<16x8xf32>
    %64 = arith.addf %59, %63 : vector<16x8xf32>
    %c0_46 = arith.constant 0 : index
    %c0_47 = arith.constant 0 : index
    %65 = vector.load %arg9[%c0_46, %c0_47] : memref<1x8xf32, #tpu.memory_space<vmem>>, vector<1x8xf32>
    %66 = vector.broadcast %65 : vector<1x8xf32> to vector<16x8xf32>
    %67 = arith.addf %64, %66 : vector<16x8xf32>
    %c0_48 = arith.constant 0 : index
    %c0_49 = arith.constant 0 : index
    %c0_50 = arith.constant 0 : index
    %68 = vector.load %arg10[%c0_48, %c0_49, %c0_50] : memref<2x16x8xf32, #tpu.memory_space<vmem>>, vector<1x16x8xf32>
    %69 = vector.shape_cast %68 : vector<1x16x8xf32> to vector<16x8xf32>
    %70 = vector.shape_cast %67 : vector<16x8xf32> to vector<1x16x8xf32>
    tpu.vector_store %arg10[%c0_48, %c0_49, %c0_50], %70 {strides = array<i32>} : memref<2x16x8xf32, #tpu.memory_space<vmem>>, vector<1x16x8xf32>,
    %c1_51 = arith.constant 1 : index
    %c0_52 = arith.constant 0 : index
    %c0_53 = arith.constant 0 : index
    %71 = vector.load %arg1[%c1_51, %c0_52, %c0_53] : memref<2x4x32xbf16, #tpu.memory_space<vmem>>, vector<1x4x32xbf16>
    %72 = vector.shape_cast %71 : vector<1x4x32xbf16> to vector<4x32xbf16>
    %c0_54 = arith.constant 0 : index
    %c0_55 = arith.constant 0 : index
    %73 = vector.load %arg2[%c0_54, %c0_55] : memref<11x4xbf16, #tpu.memory_space<vmem>>, vector<11x4xbf16>
    %cst_56 = arith.constant dense<0.000000e+00> : vector<11x32xf32>
    %74 = tpu.matmul %73, %72, %cst_56 {dimension_numbers = #tpu.dot_dimension_numbers<[1], [0], [0], [1], [0, 0, 1, 1], [], []>} : vector<11x4xbf16>, vector<4x32xbf16>, vector<11x32xf32> -> vector<11x32xf32>
    %75 = arith.truncf %74 : vector<11x32xf32> to vector<11x32xbf16>
    %cst_57 = arith.constant 0.000000e+00 : f32
    %76 = vector.broadcast %cst_57 : f32 to vector<8x16xf32>
    %77 = vector.extract_strided_slice %75 {offsets = [0, 0], sizes = [8, 32], strides = [1, 1]} : vector<11x32xbf16> to vector<8x32xbf16>
    %c0_58 = arith.constant 0 : index
    %c0_59 = arith.constant 0 : index
    %c0_60 = arith.constant 0 : index
    %78 = vector.load %arg3[%c0_58, %c0_59, %c0_60] : memref<4x32x16xbf16, #tpu.memory_space<vmem>>, vector<1x32x16xbf16>
    %79 = vector.shape_cast %78 : vector<1x32x16xbf16> to vector<32x16xbf16>
    %cst_61 = arith.constant dense<0.000000e+00> : vector<8x16xf32>
    %80 = tpu.matmul %77, %79, %cst_61 {dimension_numbers = #tpu.dot_dimension_numbers<[1], [0], [0], [1], [0, 0, 1, 1], [], []>} : vector<8x32xbf16>, vector<32x16xbf16>, vector<8x16xf32> -> vector<8x16xf32>
    %81 = arith.addf %76, %80 : vector<8x16xf32>
    %82 = vector.extract_strided_slice %75 {offsets = [1, 0], sizes = [8, 32], strides = [1, 1]} : vector<11x32xbf16> to vector<8x32xbf16>
    %c1_62 = arith.constant 1 : index
    %c0_63 = arith.constant 0 : index
    %c0_64 = arith.constant 0 : index
    %83 = vector.load %arg3[%c1_62, %c0_63, %c0_64] : memref<4x32x16xbf16, #tpu.memory_space<vmem>>, vector<1x32x16xbf16>
    %84 = vector.shape_cast %83 : vector<1x32x16xbf16> to vector<32x16xbf16>
    %cst_65 = arith.constant dense<0.000000e+00> : vector<8x16xf32>
    %85 = tpu.matmul %82, %84, %cst_65 {dimension_numbers = #tpu.dot_dimension_numbers<[1], [0], [0], [1], [0, 0, 1, 1], [], []>} : vector<8x32xbf16>, vector<32x16xbf16>, vector<8x16xf32> -> vector<8x16xf32>
    %86 = arith.addf %81, %85 : vector<8x16xf32>
    %87 = vector.extract_strided_slice %75 {offsets = [2, 0], sizes = [8, 32], strides = [1, 1]} : vector<11x32xbf16> to vector<8x32xbf16>
    %c2_66 = arith.constant 2 : index
    %c0_67 = arith.constant 0 : index
    %c0_68 = arith.constant 0 : index
    %88 = vector.load %arg3[%c2_66, %c0_67, %c0_68] : memref<4x32x16xbf16, #tpu.memory_space<vmem>>, vector<1x32x16xbf16>
    %89 = vector.shape_cast %88 : vector<1x32x16xbf16> to vector<32x16xbf16>
    %cst_69 = arith.constant dense<0.000000e+00> : vector<8x16xf32>
    %90 = tpu.matmul %87, %89, %cst_69 {dimension_numbers = #tpu.dot_dimension_numbers<[1], [0], [0], [1], [0, 0, 1, 1], [], []>} : vector<8x32xbf16>, vector<32x16xbf16>, vector<8x16xf32> -> vector<8x16xf32>
    %91 = arith.addf %86, %90 : vector<8x16xf32>
    %92 = vector.extract_strided_slice %75 {offsets = [3, 0], sizes = [8, 32], strides = [1, 1]} : vector<11x32xbf16> to vector<8x32xbf16>
    %c3_70 = arith.constant 3 : index
    %c0_71 = arith.constant 0 : index
    %c0_72 = arith.constant 0 : index
    %93 = vector.load %arg3[%c3_70, %c0_71, %c0_72] : memref<4x32x16xbf16, #tpu.memory_space<vmem>>, vector<1x32x16xbf16>
    %94 = vector.shape_cast %93 : vector<1x32x16xbf16> to vector<32x16xbf16>
    %cst_73 = arith.constant dense<0.000000e+00> : vector<8x16xf32>
    %95 = tpu.matmul %92, %94, %cst_73 {dimension_numbers = #tpu.dot_dimension_numbers<[1], [0], [0], [1], [0, 0, 1, 1], [], []>} : vector<8x32xbf16>, vector<32x16xbf16>, vector<8x16xf32> -> vector<8x16xf32>
    %96 = arith.addf %91, %95 : vector<8x16xf32>
    %c0_74 = arith.constant 0 : index
    %c0_75 = arith.constant 0 : index
    %97 = vector.load %arg4[%c0_74, %c0_75] : memref<1x16xf32, #tpu.memory_space<vmem>>, vector<1x16xf32>
    %98 = vector.broadcast %97 : vector<1x16xf32> to vector<8x16xf32>
    %99 = arith.addf %96, %98 : vector<8x16xf32>
    %c0_76 = arith.constant 0 : index
    %c0_77 = arith.constant 0 : index
    %100 = vector.load %arg5[%c0_76, %c0_77] : memref<1x16xf32, #tpu.memory_space<vmem>>, vector<1x16xf32>
    %101 = vector.broadcast %100 : vector<1x16xf32> to vector<8x16xf32>
    %102 = arith.mulf %99, %101 : vector<8x16xf32>
    %c0_78 = arith.constant 0 : index
    %c0_79 = arith.constant 0 : index
    %103 = vector.load %arg6[%c0_78, %c0_79] : memref<1x16xf32, #tpu.memory_space<vmem>>, vector<1x16xf32>
    %104 = vector.broadcast %103 : vector<1x16xf32> to vector<8x16xf32>
    %105 = arith.addf %102, %104 : vector<8x16xf32>
    %cst_80 = arith.constant 0.000000e+00 : f32
    %106 = vector.broadcast %cst_80 : f32 to vector<8x16xf32>
    %107 = arith.cmpf ogt, %105, %106 : vector<8x16xf32>
    %cst_81 = arith.constant 1.000000e-01 : f32
    %108 = vector.broadcast %cst_81 : f32 to vector<8x16xf32>
    %109 = arith.mulf %108, %105 : vector<8x16xf32>
    %110 = arith.select %107, %105, %109 : vector<8x16xi1>, vector<8x16xf32>
    %111 = arith.truncf %110 : vector<8x16xf32> to vector<8x16xbf16>
    %c0_82 = arith.constant 0 : index
    %c0_83 = arith.constant 0 : index
    %112 = vector.load %arg7[%c0_82, %c0_83] : memref<19x8xbf16, #tpu.memory_space<vmem>>, vector<19x8xbf16>
    %cst_84 = arith.constant dense<0.000000e+00> : vector<19x16xf32>
    %113 = tpu.matmul %112, %111, %cst_84 {dimension_numbers = #tpu.dot_dimension_numbers<[1], [0], [0], [1], [0, 0, 1, 1], [], []>} : vector<19x8xbf16>, vector<8x16xbf16>, vector<19x16xf32> -> vector<19x16xf32>
    %114 = arith.truncf %113 : vector<19x16xf32> to vector<19x16xbf16>
    %cst_85 = arith.constant 0.000000e+00 : f32
    %115 = vector.broadcast %cst_85 : f32 to vector<16x8xf32>
    %116 = vector.extract_strided_slice %114 {offsets = [0, 0], sizes = [16, 16], strides = [1, 1]} : vector<19x16xbf16> to vector<16x16xbf16>
    %c0_86 = arith.constant 0 : index
    %c0_87 = arith.constant 0 : index
    %c0_88 = arith.constant 0 : index
    %117 = vector.load %arg8[%c0_86, %c0_87, %c0_88] : memref<4x16x8xbf16, #tpu.memory_space<vmem>>, vector<1x16x8xbf16>
    %118 = vector.shape_cast %117 : vector<1x16x8xbf16> to vector<16x8xbf16>
    %cst_89 = arith.constant dense<0.000000e+00> : vector<16x8xf32>
    %119 = tpu.matmul %116, %118, %cst_89 {dimension_numbers = #tpu.dot_dimension_numbers<[1], [0], [0], [1], [0, 0, 1, 1], [], []>} : vector<16x16xbf16>, vector<16x8xbf16>, vector<16x8xf32> -> vector<16x8xf32>
    %120 = arith.addf %115, %119 : vector<16x8xf32>
    %121 = vector.extract_strided_slice %114 {offsets = [1, 0], sizes = [16, 16], strides = [1, 1]} : vector<19x16xbf16> to vector<16x16xbf16>
    %c1_90 = arith.constant 1 : index
    %c0_91 = arith.constant 0 : index
    %c0_92 = arith.constant 0 : index
    %122 = vector.load %arg8[%c1_90, %c0_91, %c0_92] : memref<4x16x8xbf16, #tpu.memory_space<vmem>>, vector<1x16x8xbf16>
    %123 = vector.shape_cast %122 : vector<1x16x8xbf16> to vector<16x8xbf16>
    %cst_93 = arith.constant dense<0.000000e+00> : vector<16x8xf32>
    %124 = tpu.matmul %121, %123, %cst_93 {dimension_numbers = #tpu.dot_dimension_numbers<[1], [0], [0], [1], [0, 0, 1, 1], [], []>} : vector<16x16xbf16>, vector<16x8xbf16>, vector<16x8xf32> -> vector<16x8xf32>
    %125 = arith.addf %120, %124 : vector<16x8xf32>
    %126 = vector.extract_strided_slice %114 {offsets = [2, 0], sizes = [16, 16], strides = [1, 1]} : vector<19x16xbf16> to vector<16x16xbf16>
    %c2_94 = arith.constant 2 : index
    %c0_95 = arith.constant 0 : index
    %c0_96 = arith.constant 0 : index
    %127 = vector.load %arg8[%c2_94, %c0_95, %c0_96] : memref<4x16x8xbf16, #tpu.memory_space<vmem>>, vector<1x16x8xbf16>
    %128 = vector.shape_cast %127 : vector<1x16x8xbf16> to vector<16x8xbf16>
    %cst_97 = arith.constant dense<0.000000e+00> : vector<16x8xf32>
    %129 = tpu.matmul %126, %128, %cst_97 {dimension_numbers = #tpu.dot_dimension_numbers<[1], [0], [0], [1], [0, 0, 1, 1], [], []>} : vector<16x16xbf16>, vector<16x8xbf16>, vector<16x8xf32> -> vector<16x8xf32>
    %130 = arith.addf %125, %129 : vector<16x8xf32>
    %131 = vector.extract_strided_slice %114 {offsets = [3, 0], sizes = [16, 16], strides = [1, 1]} : vector<19x16xbf16> to vector<16x16xbf16>
    %c3_98 = arith.constant 3 : index
    %c0_99 = arith.constant 0 : index
    %c0_100 = arith.constant 0 : index
    %132 = vector.load %arg8[%c3_98, %c0_99, %c0_100] : memref<4x16x8xbf16, #tpu.memory_space<vmem>>, vector<1x16x8xbf16>
    %133 = vector.shape_cast %132 : vector<1x16x8xbf16> to vector<16x8xbf16>
    %cst_101 = arith.constant dense<0.000000e+00> : vector<16x8xf32>
    %134 = tpu.matmul %131, %133, %cst_101 {dimension_numbers = #tpu.dot_dimension_numbers<[1], [0], [0], [1], [0, 0, 1, 1], [], []>} : vector<16x16xbf16>, vector<16x8xbf16>, vector<16x8xf32> -> vector<16x8xf32>
    %135 = arith.addf %130, %134 : vector<16x8xf32>
    %c0_102 = arith.constant 0 : index
    %c0_103 = arith.constant 0 : index
    %136 = vector.load %arg9[%c0_102, %c0_103] : memref<1x8xf32, #tpu.memory_space<vmem>>, vector<1x8xf32>
    %137 = vector.broadcast %136 : vector<1x8xf32> to vector<16x8xf32>
    %138 = arith.addf %135, %137 : vector<16x8xf32>
    %c1_104 = arith.constant 1 : index
    %c0_105 = arith.constant 0 : index
    %c0_106 = arith.constant 0 : index
    %139 = vector.load %arg10[%c1_104, %c0_105, %c0_106] : memref<2x16x8xf32, #tpu.memory_space<vmem>>, vector<1x16x8xf32>
    %140 = vector.shape_cast %139 : vector<1x16x8xf32> to vector<16x8xf32>
    %141 = vector.shape_cast %138 : vector<16x8xf32> to vector<1x16x8xf32>
    tpu.vector_store %arg10[%c1_104, %c0_105, %c0_106], %141 {strides = array<i32>} : memref<2x16x8xf32, #tpu.memory_space<vmem>>, vector<1x16x8xf32>,
    return
  }
  func.func @transform_0(%arg0: i32) -> (i32, i32, i32) {
    %c0_i32 = arith.constant 0 : i32
    %c0_i32_0 = arith.constant 0 : i32
    %c0_i32_1 = arith.constant 0 : i32
    return %arg0, %c0_i32, %c0_i32_0 : i32, i32, i32
  }
  func.func @transform_1(%arg0: i32) -> (i32, i32) {
    %c0_i32 = arith.constant 0 : i32
    %c0_i32_0 = arith.constant 0 : i32
    %c0_i32_1 = arith.constant 0 : i32
    return %c0_i32, %c0_i32_0 : i32, i32
  }
  func.func @transform_2(%arg0: i32) -> (i32, i32, i32) {
    %c0_i32 = arith.constant 0 : i32
    %c0_i32_0 = arith.constant 0 : i32
    %c0_i32_1 = arith.constant 0 : i32
    %c0_i32_2 = arith.constant 0 : i32
    return %c0_i32, %c0_i32_0, %c0_i32_1 : i32, i32, i32
  }
  func.func @transform_3(%arg0: i32) -> (i32, i32) {
    %c0_i32 = arith.constant 0 : i32
    %c0_i32_0 = arith.constant 0 : i32
    %c0_i32_1 = arith.constant 0 : i32
    return %c0_i32, %c0_i32_0 : i32, i32
  }
  func.func @transform_4(%arg0: i32) -> (i32, i32) {
    %c0_i32 = arith.constant 0 : i32
    %c0_i32_0 = arith.constant 0 : i32
    %c0_i32_1 = arith.constant 0 : i32
    return %c0_i32, %c0_i32_0 : i32, i32
  }
  func.func @transform_5(%arg0: i32) -> (i32, i32) {
    %c0_i32 = arith.constant 0 : i32
    %c0_i32_0 = arith.constant 0 : i32
    %c0_i32_1 = arith.constant 0 : i32
    return %c0_i32, %c0_i32_0 : i32, i32
  }
  func.func @transform_6(%arg0: i32) -> (i32, i32) {
    %c0_i32 = arith.constant 0 : i32
    %c0_i32_0 = arith.constant 0 : i32
    %c0_i32_1 = arith.constant 0 : i32
    return %c0_i32, %c0_i32_0 : i32, i32
  }
  func.func @transform_7(%arg0: i32) -> (i32, i32, i32) {
    %c0_i32 = arith.constant 0 : i32
    %c0_i32_0 = arith.constant 0 : i32
    %c0_i32_1 = arith.constant 0 : i32
    %c0_i32_2 = arith.constant 0 : i32
    return %c0_i32, %c0_i32_0, %c0_i32_1 : i32, i32, i32
  }
  func.func @transform_8(%arg0: i32) -> (i32, i32) {
    %c0_i32 = arith.constant 0 : i32
    %c0_i32_0 = arith.constant 0 : i32
    %c0_i32_1 = arith.constant 0 : i32
    return %c0_i32, %c0_i32_0 : i32, i32
  }
  func.func @transform_9(%arg0: i32) -> (i32, i32, i32) {
    %c0_i32 = arith.constant 0 : i32
    %c0_i32_0 = arith.constant 0 : i32
    %c0_i32_1 = arith.constant 0 : i32
    return %arg0, %c0_i32, %c0_i32_0 : i32, i32, i32
  }
}

</mosaic_0001>

<llo_original>
// kernel: tpu_custom_call.1
$region0: #{tpu_custom_call.1}
  #allocation0 [shape = 'u32[]', space=smem, size = 0x4, offset = 0x4, fixed_abs, tag = 'smem constant byte address 0x4 - core index']
  #allocation1 [shape = 'u32[144,128]{1,0:T(1,128)}', space=vmem, size = 0x12000, scoped, tag = 'internal scratch']
  %s0 = inlined_call_operand.vmem [shape: bf16[4,4,32], index: 0, kind: input, shape index: {}]
  %s1 = inlined_call_operand.vmem [shape: bf16[11,4], index: 1, kind: input, shape index: {}]
  %s2 = inlined_call_operand.vmem [shape: bf16[4,32,16], index: 2, kind: input, shape index: {}]
  %s3 = inlined_call_operand.vmem [shape: f32[1,16], index: 3, kind: input, shape index: {}]
  %s4 = inlined_call_operand.vmem [shape: f32[1,16], index: 4, kind: input, shape index: {}]
  %s5 = inlined_call_operand.vmem [shape: f32[1,16], index: 5, kind: input, shape index: {}]
  %s6 = inlined_call_operand.vmem [shape: bf16[19,8], index: 6, kind: input, shape index: {}]
  %s7 = inlined_call_operand.vmem [shape: bf16[4,16,8], index: 7, kind: input, shape index: {}]
  %s8 = inlined_call_operand.vmem [shape: f32[1,8], index: 8, kind: input, shape index: {}]
  %s9 = inlined_call_operand.vmem [shape: f32[4,16,8], index: 9, kind: output, shape index: {}]
  %s10 = sld [smem:[#allocation0]]
  $region69: #{tpu_custom_call.1} parent=0
    _
  %s12 = ssub.s32 1, %s10
  %s13 = scalar_select 0, %s12, %s10
  loop: start=0, step=1, limit=4
  $region2: #{tpu_custom_call.1} parent=0 // loop_pre_header
    _
  $region3: #{tpu_custom_call.1} parent=0 // loop_header
    %s15 = sphi 0, %s19
    %p16 = scmp.ge.s32.totalorder %s15, 4
    %s25 = sphi 0, %s27
    %s28 = sphi 0, %s25
    %s29 = sphi 0, %s28
    %s45 = sphi 0, %s29
    %s49 = sphi 0, %s49
    %s51 = sphi 0, %s49
    %s52 = sphi 0, %s51
    %s66 = sphi 0, %s52
    %s70 = sphi 0, %s70
    %s72 = sphi 0, %s70
    %s73 = sphi 0, %s72
    %s87 = sphi 0, %s73
    %s91 = sphi 0, %s91
    %s93 = sphi 0, %s91
    %s94 = sphi 0, %s93
    %s108 = sphi 0, %s94
    %s112 = sphi 0, %s112
    %s114 = sphi 0, %s112
    %s115 = sphi 0, %s114
    %s129 = sphi 0, %s115
    %s133 = sphi 0, %s133
    %s135 = sphi 0, %s133
    %s136 = sphi 0, %s135
    %s150 = sphi 0, %s136
    %s154 = sphi 0, %s154
    %s156 = sphi 0, %s154
    %s157 = sphi 0, %s156
    %s171 = sphi 0, %s157
    %s175 = sphi 0, %s175
    %s177 = sphi 0, %s175
    %s178 = sphi 0, %s177
    %s192 = sphi 0, %s178
    %s196 = sphi 0, %s196
    %s198 = sphi 0, %s196
    %s199 = sphi 0, %s198
    %s213 = sphi 0, %s199
    %s219 = sphi 0, %s221
    %s222 = sphi 0, %s219
    %s223 = sphi 0, %s222
    %s239 = sphi 0, %s223
  $region4: #{tpu_custom_call.1} parent=0 // loop_header_branch
    %18 = sbr.rel (%p16) target = $region8
  $region5: #{tpu_custom_call.1} parent=0 // loop_body
    %s20 = ssub.s32 %s15, 1
    %s21 = ssub.s32 %s15, 2
    %s22 = sadd.s32 %s15, 1
    %s23 = ssub.s32 %s15, %s22
    %p24 = scmp.eq.s32.totalorder %s23, 0
    %s26 = sadd.s32 %s25, 1
    %s27 = scalar_select %p24, %s25, %s26
    %p30 = pneg %p24
    %p31 = scmp.eq.s32.totalorder %s15, 1
    %p32 = por %p30, %p31
    %p33 = scmp.ne.s32.totalorder %s25, %s28
    %p34 = scmp.eq.s32.totalorder %s15, 0
    %p35 = por %p33, %p34
    %p36 = scmp.ne.s32.totalorder %s25, %s28
    %p37 = scmp.eq.s32.totalorder %s20, 1
    %p38 = por %p36, %p37
    %p39 = scmp.ne.s32.totalorder %s28, %s29
    %p40 = scmp.eq.s32.totalorder %s20, 0
    %p41 = por %p39, %p40
    %p42 = scmp.ne.s32.totalorder %s28, %s29
    %p43 = scmp.eq.s32.totalorder %s21, 1
    %p44 = por %p42, %p43
    %p46 = scmp.ne.s32.totalorder %s29, %s45
    %p47 = scmp.eq.s32.totalorder %s21, 0
    %p48 = por %p46, %p47
    %s50 = sadd.s32 %s49, 1
    %p53 = scmp.eq.s32.totalorder %s15, 1
    %p54 = scmp.ne.s32.totalorder %s49, %s51
    %p55 = scmp.eq.s32.totalorder %s15, 0
    %p56 = por %p54, %p55
    %p57 = scmp.ne.s32.totalorder %s49, %s51
    %p58 = scmp.eq.s32.totalorder %s20, 1
    %p59 = por %p57, %p58
    %p60 = scmp.ne.s32.totalorder %s51, %s52
    %p61 = scmp.eq.s32.totalorder %s20, 0
    %p62 = por %p60, %p61
    %p63 = scmp.ne.s32.totalorder %s51, %s52
    %p64 = scmp.eq.s32.totalorder %s21, 1
    %p65 = por %p63, %p64
    %p67 = scmp.ne.s32.totalorder %s52, %s66
    %p68 = scmp.eq.s32.totalorder %s21, 0
    %p69 = por %p67, %p68
    %s71 = sadd.s32 %s70, 1
    %p74 = scmp.eq.s32.totalorder %s15, 1
    %p75 = scmp.ne.s32.totalorder %s70, %s72
    %p76 = scmp.eq.s32.totalorder %s15, 0
    %p77 = por %p75, %p76
    %p78 = scmp.ne.s32.totalorder %s70, %s72
    %p79 = scmp.eq.s32.totalorder %s20, 1
    %p80 = por %p78, %p79
    %p81 = scmp.ne.s32.totalorder %s72, %s73
    %p82 = scmp.eq.s32.totalorder %s20, 0
    %p83 = por %p81, %p82
    %p84 = scmp.ne.s32.totalorder %s72, %s73
    %p85 = scmp.eq.s32.totalorder %s21, 1
    %p86 = por %p84, %p85
    %p88 = scmp.ne.s32.totalorder %s73, %s87
    %p89 = scmp.eq.s32.totalorder %s21, 0
    %p90 = por %p88, %p89
    %s92 = sadd.s32 %s91, 1
    %p95 = scmp.eq.s32.totalorder %s15, 1
    %p96 = scmp.ne.s32.totalorder %s91, %s93
    %p97 = scmp.eq.s32.totalorder %s15, 0
    %p98 = por %p96, %p97
    %p99 = scmp.ne.s32.totalorder %s91, %s93
    %p100 = scmp.eq.s32.totalorder %s20, 1
    %p101 = por %p99, %p100
    %p102 = scmp.ne.s32.totalorder %s93, %s94
    %p103 = scmp.eq.s32.totalorder %s20, 0
    %p104 = por %p102, %p103
    %p105 = scmp.ne.s32.totalorder %s93, %s94
    %p106 = scmp.eq.s32.totalorder %s21, 1
    %p107 = por %p105, %p106
    %p109 = scmp.ne.s32.totalorder %s94, %s108
    %p110 = scmp.eq.s32.totalorder %s21, 0
    %p111 = por %p109, %p110
    %s113 = sadd.s32 %s112, 1
    %p116 = scmp.eq.s32.totalorder %s15, 1
    %p117 = scmp.ne.s32.totalorder %s112, %s114
    %p118 = scmp.eq.s32.totalorder %s15, 0
    %p119 = por %p117, %p118
    %p120 = scmp.ne.s32.totalorder %s112, %s114
    %p121 = scmp.eq.s32.totalorder %s20, 1
    %p122 = por %p120, %p121
    %p123 = scmp.ne.s32.totalorder %s114, %s115
    %p124 = scmp.eq.s32.totalorder %s20, 0
    %p125 = por %p123, %p124
    %p126 = scmp.ne.s32.totalorder %s114, %s115
    %p127 = scmp.eq.s32.totalorder %s21, 1
    %p128 = por %p126, %p127
    %p130 = scmp.ne.s32.totalorder %s115, %s129
    %p131 = scmp.eq.s32.totalorder %s21, 0
    %p132 = por %p130, %p131
    %s134 = sadd.s32 %s133, 1
    %p137 = scmp.eq.s32.totalorder %s15, 1
    %p138 = scmp.ne.s32.totalorder %s133, %s135
    %p139 = scmp.eq.s32.totalorder %s15, 0
    %p140 = por %p138, %p139
    %p141 = scmp.ne.s32.totalorder %s133, %s135
    %p142 = scmp.eq.s32.totalorder %s20, 1
    %p143 = por %p141, %p142
    %p144 = scmp.ne.s32.totalorder %s135, %s136
    %p145 = scmp.eq.s32.totalorder %s20, 0
    %p146 = por %p144, %p145
    %p147 = scmp.ne.s32.totalorder %s135, %s136
    %p148 = scmp.eq.s32.totalorder %s21, 1
    %p149 = por %p147, %p148
    %p151 = scmp.ne.s32.totalorder %s136, %s150
    %p152 = scmp.eq.s32.totalorder %s21, 0
    %p153 = por %p151, %p152
    %s155 = sadd.s32 %s154, 1
    %p158 = scmp.eq.s32.totalorder %s15, 1
    %p159 = scmp.ne.s32.totalorder %s154, %s156
    %p160 = scmp.eq.s32.totalorder %s15, 0
    %p161 = por %p159, %p160
    %p162 = scmp.ne.s32.totalorder %s154, %s156
    %p163 = scmp.eq.s32.totalorder %s20, 1
    %p164 = por %p162, %p163
    %p165 = scmp.ne.s32.totalorder %s156, %s157
    %p166 = scmp.eq.s32.totalorder %s20, 0
    %p167 = por %p165, %p166
    %p168 = scmp.ne.s32.totalorder %s156, %s157
    %p169 = scmp.eq.s32.totalorder %s21, 1
    %p170 = por %p168, %p169
    %p172 = scmp.ne.s32.totalorder %s157, %s171
    %p173 = scmp.eq.s32.totalorder %s21, 0
    %p174 = por %p172, %p173
    %s176 = sadd.s32 %s175, 1
    %p179 = scmp.eq.s32.totalorder %s15, 1
    %p180 = scmp.ne.s32.totalorder %s175, %s177
    %p181 = scmp.eq.s32.totalorder %s15, 0
    %p182 = por %p180, %p181
    %p183 = scmp.ne.s32.totalorder %s175, %s177
    %p184 = scmp.eq.s32.totalorder %s20, 1
    %p185 = por %p183, %p184
    %p186 = scmp.ne.s32.totalorder %s177, %s178
    %p187 = scmp.eq.s32.totalorder %s20, 0
    %p188 = por %p186, %p187
    %p189 = scmp.ne.s32.totalorder %s177, %s178
    %p190 = scmp.eq.s32.totalorder %s21, 1
    %p191 = por %p189, %p190
    %p193 = scmp.ne.s32.totalorder %s178, %s192
    %p194 = scmp.eq.s32.totalorder %s21, 0
    %p195 = por %p193, %p194
    %s197 = sadd.s32 %s196, 1
    %p200 = scmp.eq.s32.totalorder %s15, 1
    %p201 = scmp.ne.s32.totalorder %s196, %s198
    %p202 = scmp.eq.s32.totalorder %s15, 0
    %p203 = por %p201, %p202
    %p204 = scmp.ne.s32.totalorder %s196, %s198
    %p205 = scmp.eq.s32.totalorder %s20, 1
    %p206 = por %p204, %p205
    %p207 = scmp.ne.s32.totalorder %s198, %s199
    %p208 = scmp.eq.s32.totalorder %s20, 0
    %p209 = por %p207, %p208
    %p210 = scmp.ne.s32.totalorder %s198, %s199
    %p211 = scmp.eq.s32.totalorder %s21, 1
    %p212 = por %p210, %p211
    %p214 = scmp.ne.s32.totalorder %s199, %s213
    %p215 = scmp.eq.s32.totalorder %s21, 0
    %p216 = por %p214, %p215
    %s217 = ssub.s32 %s15, %s22
    %p218 = scmp.eq.s32.totalorder %s217, 0
    %s220 = sadd.s32 %s219, 1
    %s221 = scalar_select %p218, %s219, %s220
    %p224 = pneg %p218
    %p225 = scmp.eq.s32.totalorder %s15, 1
    %p226 = por %p224, %p225
    %p227 = scmp.ne.s32.totalorder %s219, %s222
    %p228 = scmp.eq.s32.totalorder %s15, 0
    %p229 = por %p227, %p228
    %p230 = scmp.ne.s32.totalorder %s219, %s222
    %p231 = scmp.eq.s32.totalorder %s20, 1
    %p232 = por %p230, %p231
    %p233 = scmp.ne.s32.totalorder %s222, %s223
    %p234 = scmp.eq.s32.totalorder %s20, 0
    %p235 = por %p233, %p234
    %p236 = scmp.ne.s32.totalorder %s222, %s223
    %p237 = scmp.eq.s32.totalorder %s21, 1
    %p238 = por %p236, %p237
    %p240 = scmp.ne.s32.totalorder %s223, %s239
    %p241 = scmp.eq.s32.totalorder %s21, 0
    %p242 = por %p240, %p241
    %p243 = scmp.le.s32.totalorder 1, %s15
    %p244 = scmp.lt.s32.totalorder %s15, 3
    %p245 = pnand %p243, %p244
    %p246 = pneg %p245
    // Predicated region
    $region9: #{tpu_custom_call.1} parent=5 // pred_check
      _
    $region10: #{tpu_custom_call.1} parent=5 // pred_check_branch
      %248 = sbr.rel (%p245) target = $region12
    $region11: #{tpu_custom_call.1} parent=5 // pred_region
      %s249 = ssub.s32 %s15, 1
      // Predicated region
      $region13: #{tpu_custom_call.1} parent=11 // pred_check
        %p250 = pneg %p62
      $region14: #{tpu_custom_call.1} parent=11 // pred_check_branch
        %252 = sbr.rel (%p250) target = $region16
      $region15: #{tpu_custom_call.1} parent=11 // pred_region
        _
      $region16: #{tpu_custom_call.1} parent=11 // pred_fallthru
        _
      // Predicated region
      $region17: #{tpu_custom_call.1} parent=11 // pred_check
        %p253 = pneg %p83
      $region18: #{tpu_custom_call.1} parent=11 // pred_check_branch
        %255 = sbr.rel (%p253) target = $region20
      $region19: #{tpu_custom_call.1} parent=11 // pred_region
        _
      $region20: #{tpu_custom_call.1} parent=11 // pred_fallthru
        _
      // Predicated region
      $region21: #{tpu_custom_call.1} parent=11 // pred_check
        %p256 = pneg %p104
      $region22: #{tpu_custom_call.1} parent=11 // pred_check_branch
        %258 = sbr.rel (%p256) target = $region24
      $region23: #{tpu_custom_call.1} parent=11 // pred_region
        _
      $region24: #{tpu_custom_call.1} parent=11 // pred_fallthru
        _
      // Predicated region
      $region25: #{tpu_custom_call.1} parent=11 // pred_check
        %p259 = pneg %p125
      $region26: #{tpu_custom_call.1} parent=11 // pred_check_branch
        %261 = sbr.rel (%p259) target = $region28
      $region27: #{tpu_custom_call.1} parent=11 // pred_region
        _
      $region28: #{tpu_custom_call.1} parent=11 // pred_fallthru
        _
      // Predicated region
      $region29: #{tpu_custom_call.1} parent=11 // pred_check
        %p262 = pneg %p146
      $region30: #{tpu_custom_call.1} parent=11 // pred_check_branch
        %264 = sbr.rel (%p262) target = $region32
      $region31: #{tpu_custom_call.1} parent=11 // pred_region
        _
      $region32: #{tpu_custom_call.1} parent=11 // pred_fallthru
        _
      // Predicated region
      $region33: #{tpu_custom_call.1} parent=11 // pred_check
        %p265 = pneg %p167
      $region34: #{tpu_custom_call.1} parent=11 // pred_check_branch
        %267 = sbr.rel (%p265) target = $region36
      $region35: #{tpu_custom_call.1} parent=11 // pred_region
        _
      $region36: #{tpu_custom_call.1} parent=11 // pred_fallthru
        _
      // Predicated region
      $region37: #{tpu_custom_call.1} parent=11 // pred_check
        %p268 = pneg %p188
      $region38: #{tpu_custom_call.1} parent=11 // pred_check_branch
        %270 = sbr.rel (%p268) target = $region40
      $region39: #{tpu_custom_call.1} parent=11 // pred_region
        _
      $region40: #{tpu_custom_call.1} parent=11 // pred_fallthru
        _
      // Predicated region
      $region41: #{tpu_custom_call.1} parent=11 // pred_check
        %p271 = pneg %p209
      $region42: #{tpu_custom_call.1} parent=11 // pred_check_branch
        %273 = sbr.rel (%p271) target = $region44
      $region43: #{tpu_custom_call.1} parent=11 // pred_region
        _
      $region44: #{tpu_custom_call.1} parent=11 // pred_fallthru
        _
    $region12: #{tpu_custom_call.1} parent=5 // pred_fallthru
      _
    %p274 = scmp.lt.s32.totalorder %s15, 2
    // Predicated region
    $region45: #{tpu_custom_call.1} parent=5 // pred_check
      %p275 = pneg %p274
    $region46: #{tpu_custom_call.1} parent=5 // pred_check_branch
      %277 = sbr.rel (%p275) target = $region48
    $region47: #{tpu_custom_call.1} parent=5 // pred_region
      // Predicated region
      $region49: #{tpu_custom_call.1} parent=47 // pred_check
        %p278 = pneg %p35
      $region50: #{tpu_custom_call.1} parent=47 // pred_check_branch
        %280 = sbr.rel (%p278) target = $region52
      $region51: #{tpu_custom_call.1} parent=47 // pred_region
        %s281 = smul.u32 2, %s15
        %p282 = scmp.lt.s32.totalorder %s281, 3
        %s283 = scalar_select %p282, %s281, 3
        %s284 = smul.addr %s283, 2
        %s285 = scalar_lea.vmem %s0, %s284
        %s286 = smul.u32 2, %s15
      $region52: #{tpu_custom_call.1} parent=47 // pred_fallthru
        _
    $region48: #{tpu_custom_call.1} parent=5 // pred_fallthru
      _
    %p287 = scmp.le.s32.totalorder 1, %s15
    %p288 = scmp.lt.s32.totalorder %s15, 3
    %p289 = pnand %p287, %p288
    %p290 = pneg %p289
    // Predicated region
    $region53: #{tpu_custom_call.1} parent=5 // pred_check
      _
    $region54: #{tpu_custom_call.1} parent=5 // pred_check_branch
      %292 = sbr.rel (%p289) target = $region56
    $region55: #{tpu_custom_call.1} parent=5 // pred_region
      %s293 = ssub.s32 %s15, 1
      %s294 = smul.u32 2, %s20
      %p295 = scmp.lt.s32.totalorder %s294, 3
      %s296 = scalar_select %p295, %s294, 3
      %s297 = smul.addr %s296, 2
      %s298 = scalar_lea.vmem %s0, %s297
      %p299 = pneg %p41
      %p300 = pneg %p38
      %p301 = pneg %p62
      %p302 = pneg %p59
      %p303 = pneg %p83
      %p304 = pneg %p80
      %p305 = pneg %p104
      %p306 = pneg %p101
      %p307 = pneg %p125
      %p308 = pneg %p122
      %p309 = pneg %p146
      %p310 = pneg %p143
      %p311 = pneg %p167
      %p312 = pneg %p164
      %p313 = pneg %p188
      %p314 = pneg %p185
      %p315 = pneg %p209
      %p316 = pneg %p206
      %p317 = pneg %p235
      %p318 = pneg %p232
      %s319 = smul.u32 2, %s20
      %p320 = scmp.lt.s32.totalorder %s319, 3
      %s321 = scalar_select %p320, %s319, 3
      %s322 = smul.addr %s321, 2
      %s323 = smul.addr %s322, 8
      %s324 = scalar_lea.vmem %s9, %s323
      %s325 = smul.u32 2, %s20
      %p326 = scmp.lt.s32.totalorder %s325, 3
      %s327 = scalar_select %p326, %s325, 3
      %s328 = smul.addr %s327, 2
      %s329 = scalar_lea.vmem %s0, %s328
      %s330 = smul.u32 2, %s20
      %s331 = smul.u32 2, %s20
      %p332 = scmp.lt.s32.totalorder %s331, 3
      %s333 = scalar_select %p332, %s331, 3
      %s334 = smul.addr %s333, 2
      %s335 = smul.addr %s334, 8
      %s336 = scalar_lea.vmem %s9, %s335
      %s337 = smul.u32 2, %s20
      %v339 = vld [vmem:[%s329] sm:$0x3]
      %v340 = vld [vmem:[%s1] sm:$0xf]
      %v341 = vld [vmem:[%s1 + $0x4] sm:$0x3]
      %v344 = vunpack.c.l.b16 %v340
      %v345 = vunpack.c.l.b16 %v341
      %v346 = vpack.c.b16 %v345, %v344
      %vm347 = vcmask 31744
      %v349 = vsel %vm347, %v346, 0
      %vm351 = vcmask 1041408
      %v353 = vsel %vm351, %v339, 0
      %355 = vmatprep.subr.bf16.mxu0 0
      %356 = vmatpush1.bf16.msra.mxu0 %v353
      %357 = vmatprep.subr.bf16.mxu0 0
      %358 = vmatpush1.bf16.msra.mxu0 0
      %359 = vmatprep.subr.bf16.mxu0 0
      %360 = vmatpush1.bf16.msra.mxu0 0
      %361 = vmatprep.subr.bf16.mxu0 0
      %362 = vmatpush1.bf16.msra.mxu0 0
      %363 = vmatprep.subr.bf16.mxu0 0
      %364 = vmatpush1.bf16.msra.mxu0 0
      %365 = vmatprep.subr.bf16.mxu0 0
      %366 = vmatpush1.bf16.msra.mxu0 0
      %367 = vmatprep.subr.bf16.mxu0 0
      %368 = vmatpush1.bf16.msra.mxu0 0
      %369 = vmatprep.subr.bf16.mxu0 0
      %370 = vmatpush1.bf16.msra.mxu0 0
      %371 = vmatprep.subr.bf16.mxu0 0
      %372 = vmatpush1.bf16.msra.mxu0 0
      %373 = vmatprep.subr.bf16.mxu0 0
      %374 = vmatpush1.bf16.msra.mxu0 0
      %375 = vmatprep.subr.bf16.mxu0 0
      %376 = vmatpush1.bf16.msra.mxu0 0
      %377 = vmatprep.subr.bf16.mxu0 0
      %378 = vmatpush1.bf16.msra.mxu0 0
      %379 = vmatprep.subr.bf16.mxu0 0
      %380 = vmatpush1.bf16.msra.mxu0 0
      %381 = vmatprep.subr.bf16.mxu0 0
      %382 = vmatpush1.bf16.msra.mxu0 0
      %383 = vmatprep.subr.bf16.mxu0 0
      %384 = vmatpush1.bf16.msra.mxu0 0
      %385 = vmatprep.subr.bf16.mxu0 0
      %386 = vmatpush1.bf16.msra.mxu0 0
      %387 = vmatprep.mubr.bf16.mxu0 0
      %388 = vmatmul.mubr.bf16.gmra.mrb[0].mxu0 %v349
      %v389 = vpop.f32.mrb[0].mxu0
      %v390 = vadd.f32 0.0, %v389
      %v391 = vpop.f32.mrb[0].mxu0
      %v392 = vpop.f32.mrb[0].mxu0
      %v393 = vadd.f32 0.0, %v392
      %v394 = vpop.f32.mrb[0].mxu0
      %395 = vdwg.mxu0
      %v396 = vpack.c.bf16 %v393, %v390
      %v397 = vld [vmem:[%s2] sm:$0xf]
      %v398 = vld [vmem:[%s2 + $0x4] sm:$0xf]
      %v399 = vld [vmem:[%s2 + $0x8] sm:$0xf]
      %v400 = vld [vmem:[%s2 + $0xc] sm:$0xf]
      %s401 = scalar_lea.vmem %s2, 16
      %v402 = vld [vmem:[%s401] sm:$0xf]
      %v403 = vld [vmem:[%s401 + $0x4] sm:$0xf]
      %v404 = vld [vmem:[%s401 + $0x8] sm:$0xf]
      %v405 = vld [vmem:[%s401 + $0xc] sm:$0xf]
      %v407 = vshrl.u32 %v396, 16
      %v409 = vshll.u32 %v396, 16
      %v411 = vrot.slane %v409, 1
      %v412 = vor.u32 %v407, %v411
      %v417 = vunpack.c.l.b16 %v402
      %v418 = vunpack.c.l.b16 %v403
      %v419 = vunpack.c.l.b16 %v404
      %v420 = vunpack.c.l.b16 %v405
      %v421 = vpack.c.b16 %v418, %v417
      %v422 = vpack.c.b16 %v420, %v419
      %vm425 = vcmask 261120
      %v427 = vsel %vm425, %v412, 0
      %429 = vmatprep.subr.bf16.mxu0 0
      %430 = vmatpush1.bf16.msra.mxu0 %v421
      %431 = vmatprep.subr.bf16.mxu0 0
      %432 = vmatpush1.bf16.msra.mxu0 %v422
      %433 = vmatprep.subr.bf16.mxu0 0
      %434 = vmatpush1.bf16.msra.mxu0 0
      %435 = vmatprep.subr.bf16.mxu0 0
      %436 = vmatpush1.bf16.msra.mxu0 0
      %437 = vmatprep.subr.bf16.mxu0 0
      %438 = vmatpush1.bf16.msra.mxu0 0
      %439 = vmatprep.subr.bf16.mxu0 0
      %440 = vmatpush1.bf16.msra.mxu0 0
      %441 = vmatprep.subr.bf16.mxu0 0
      %442 = vmatpush1.bf16.msra.mxu0 0
      %443 = vmatprep.subr.bf16.mxu0 0
      %444 = vmatpush1.bf16.msra.mxu0 0
      %445 = vmatprep.subr.bf16.mxu0 0
      %446 = vmatpush1.bf16.msra.mxu0 0
      %447 = vmatprep.subr.bf16.mxu0 0
      %448 = vmatpush1.bf16.msra.mxu0 0
      %449 = vmatprep.subr.bf16.mxu0 0
      %450 = vmatpush1.bf16.msra.mxu0 0
      %451 = vmatprep.subr.bf16.mxu0 0
      %452 = vmatpush1.bf16.msra.mxu0 0
      %453 = vmatprep.subr.bf16.mxu0 0
      %454 = vmatpush1.bf16.msra.mxu0 0
      %455 = vmatprep.subr.bf16.mxu0 0
      %456 = vmatpush1.bf16.msra.mxu0 0
      %457 = vmatprep.subr.bf16.mxu0 0
      %458 = vmatpush1.bf16.msra.mxu0 0
      %459 = vmatprep.subr.bf16.mxu0 0
      %460 = vmatpush1.bf16.msra.mxu0 0
      %461 = vmatprep.mubr.bf16.mxu0 0
      %462 = vmatmul.mubr.bf16.gmra.mrb[0].mxu0 %v427
      %v463 = vpop.f32.mrb[0].mxu0
      %v464 = vadd.f32 0.0, %v463
      %v465 = vpop.f32.mrb[0].mxu0
      %v466 = vpop.f32.mrb[0].mxu0
      %v467 = vpop.f32.mrb[0].mxu0
      %468 = vdwg.mxu0
      %v473 = vunpack.c.l.b16 %v397
      %v474 = vunpack.c.l.b16 %v398
      %v475 = vunpack.c.l.b16 %v399
      %v476 = vunpack.c.l.b16 %v400
      %v477 = vpack.c.b16 %v474, %v473
      %v478 = vpack.c.b16 %v476, %v475
      %v481 = vsel %vm425, %v396, 0
      %483 = vmatprep.subr.bf16.mxu0 0
      %484 = vmatpush1.bf16.msra.mxu0 %v477
      %485 = vmatprep.subr.bf16.mxu0 0
      %486 = vmatpush1.bf16.msra.mxu0 %v478
      %487 = vmatprep.subr.bf16.mxu0 0
      %488 = vmatpush1.bf16.msra.mxu0 0
      %489 = vmatprep.subr.bf16.mxu0 0
      %490 = vmatpush1.bf16.msra.mxu0 0
      %491 = vmatprep.subr.bf16.mxu0 0
      %492 = vmatpush1.bf16.msra.mxu0 0
      %493 = vmatprep.subr.bf16.mxu0 0
      %494 = vmatpush1.bf16.msra.mxu0 0
      %495 = vmatprep.subr.bf16.mxu0 0
      %496 = vmatpush1.bf16.msra.mxu0 0
      %497 = vmatprep.subr.bf16.mxu0 0
      %498 = vmatpush1.bf16.msra.mxu0 0
      %499 = vmatprep.subr.bf16.mxu0 0
      %500 = vmatpush1.bf16.msra.mxu0 0
      %501 = vmatprep.subr.bf16.mxu0 0
      %502 = vmatpush1.bf16.msra.mxu0 0
      %503 = vmatprep.subr.bf16.mxu0 0
      %504 = vmatpush1.bf16.msra.mxu0 0
      %505 = vmatprep.subr.bf16.mxu0 0
      %506 = vmatpush1.bf16.msra.mxu0 0
      %507 = vmatprep.subr.bf16.mxu0 0
      %508 = vmatpush1.bf16.msra.mxu0 0
      %509 = vmatprep.subr.bf16.mxu0 0
      %510 = vmatpush1.bf16.msra.mxu0 0
      %511 = vmatprep.subr.bf16.mxu0 0
      %512 = vmatpush1.bf16.msra.mxu0 0
      %513 = vmatprep.subr.bf16.mxu0 0
      %514 = vmatpush1.bf16.msra.mxu0 0
      %515 = vmatprep.mubr.bf16.mxu0 0
      %516 = vmatmul.mubr.bf16.gmra.mrb[0].mxu0 %v481
      %v517 = vpop.f32.mrb[0].mxu0
      %v518 = vadd.f32 %v464, %v517
      %v519 = vpop.f32.mrb[0].mxu0
      %v520 = vpop.f32.mrb[0].mxu0
      %v521 = vpop.f32.mrb[0].mxu0
      %522 = vdwg.mxu0
      %s523 = scalar_lea.vmem %s2, 32
      %v524 = vld [vmem:[%s523] sm:$0xf]
      %v525 = vld [vmem:[%s523 + $0x4] sm:$0xf]
      %v526 = vld [vmem:[%s523 + $0x8] sm:$0xf]
      %v527 = vld [vmem:[%s523 + $0xc] sm:$0xf]
      %v529 = vrot.slane %v396, 1
      %v534 = vunpack.c.l.b16 %v524
      %v535 = vunpack.c.l.b16 %v525
      %v536 = vunpack.c.l.b16 %v526
      %v537 = vunpack.c.l.b16 %v527
      %v538 = vpack.c.b16 %v535, %v534
      %v539 = vpack.c.b16 %v537, %v536
      %v543 = vsel %vm425, %v529, 0
      %545 = vmatprep.subr.bf16.mxu0 0
      %546 = vmatpush1.bf16.msra.mxu0 %v538
      %547 = vmatprep.subr.bf16.mxu0 0
      %548 = vmatpush1.bf16.msra.mxu0 %v539
      %549 = vmatprep.subr.bf16.mxu0 0
      %550 = vmatpush1.bf16.msra.mxu0 0
      %551 = vmatprep.subr.bf16.mxu0 0
      %552 = vmatpush1.bf16.msra.mxu0 0
      %553 = vmatprep.subr.bf16.mxu0 0
      %554 = vmatpush1.bf16.msra.mxu0 0
      %555 = vmatprep.subr.bf16.mxu0 0
      %556 = vmatpush1.bf16.msra.mxu0 0
      %557 = vmatprep.subr.bf16.mxu0 0
      %558 = vmatpush1.bf16.msra.mxu0 0
      %559 = vmatprep.subr.bf16.mxu0 0
      %560 = vmatpush1.bf16.msra.mxu0 0
      %561 = vmatprep.subr.bf16.mxu0 0
      %562 = vmatpush1.bf16.msra.mxu0 0
      %563 = vmatprep.subr.bf16.mxu0 0
      %564 = vmatpush1.bf16.msra.mxu0 0
      %565 = vmatprep.subr.bf16.mxu0 0
      %566 = vmatpush1.bf16.msra.mxu0 0
      %567 = vmatprep.subr.bf16.mxu0 0
      %568 = vmatpush1.bf16.msra.mxu0 0
      %569 = vmatprep.subr.bf16.mxu0 0
      %570 = vmatpush1.bf16.msra.mxu0 0
      %571 = vmatprep.subr.bf16.mxu0 0
      %572 = vmatpush1.bf16.msra.mxu0 0
      %573 = vmatprep.subr.bf16.mxu0 0
      %574 = vmatpush1.bf16.msra.mxu0 0
      %575 = vmatprep.subr.bf16.mxu0 0
      %576 = vmatpush1.bf16.msra.mxu0 0
      %577 = vmatprep.mubr.bf16.mxu0 0
      %578 = vmatmul.mubr.bf16.gmra.mrb[0].mxu0 %v543
      %v579 = vpop.f32.mrb[0].mxu0
      %v580 = vadd.f32 0.0, %v579
      %v581 = vpop.f32.mrb[0].mxu0
      %v582 = vpop.f32.mrb[0].mxu0
      %v583 = vpop.f32.mrb[0].mxu0
      %584 = vdwg.mxu0
      %v585 = vadd.f32 %v518, %v580
      %s586 = scalar_lea.vmem %s2, 48
      %v587 = vld [vmem:[%s586] sm:$0xf]
      %v588 = vld [vmem:[%s586 + $0x4] sm:$0xf]
      %v589 = vld [vmem:[%s586 + $0x8] sm:$0xf]
      %v590 = vld [vmem:[%s586 + $0xc] sm:$0xf]
      %v591 = vrot.slane %v407, 1
      %v592 = vrot.slane %v409, 2
      %v593 = vor.u32 %v591, %v592
      %v598 = vunpack.c.l.b16 %v587
      %v599 = vunpack.c.l.b16 %v588
      %v600 = vunpack.c.l.b16 %v589
      %v601 = vunpack.c.l.b16 %v590
      %v602 = vpack.c.b16 %v599, %v598
      %v603 = vpack.c.b16 %v601, %v600
      %v607 = vsel %vm425, %v593, 0
      %609 = vmatprep.subr.bf16.mxu0 0
      %610 = vmatpush1.bf16.msra.mxu0 %v602
      %611 = vmatprep.subr.bf16.mxu0 0
      %612 = vmatpush1.bf16.msra.mxu0 %v603
      %613 = vmatprep.subr.bf16.mxu0 0
      %614 = vmatpush1.bf16.msra.mxu0 0
      %615 = vmatprep.subr.bf16.mxu0 0
      %616 = vmatpush1.bf16.msra.mxu0 0
      %617 = vmatprep.subr.bf16.mxu0 0
      %618 = vmatpush1.bf16.msra.mxu0 0
      %619 = vmatprep.subr.bf16.mxu0 0
      %620 = vmatpush1.bf16.msra.mxu0 0
      %621 = vmatprep.subr.bf16.mxu0 0
      %622 = vmatpush1.bf16.msra.mxu0 0
      %623 = vmatprep.subr.bf16.mxu0 0
      %624 = vmatpush1.bf16.msra.mxu0 0
      %625 = vmatprep.subr.bf16.mxu0 0
      %626 = vmatpush1.bf16.msra.mxu0 0
      %627 = vmatprep.subr.bf16.mxu0 0
      %628 = vmatpush1.bf16.msra.mxu0 0
      %629 = vmatprep.subr.bf16.mxu0 0
      %630 = vmatpush1.bf16.msra.mxu0 0
      %631 = vmatprep.subr.bf16.mxu0 0
      %632 = vmatpush1.bf16.msra.mxu0 0
      %633 = vmatprep.subr.bf16.mxu0 0
      %634 = vmatpush1.bf16.msra.mxu0 0
      %635 = vmatprep.subr.bf16.mxu0 0
      %636 = vmatpush1.bf16.msra.mxu0 0
      %637 = vmatprep.subr.bf16.mxu0 0
      %638 = vmatpush1.bf16.msra.mxu0 0
      %639 = vmatprep.subr.bf16.mxu0 0
      %640 = vmatpush1.bf16.msra.mxu0 0
      %641 = vmatprep.mubr.bf16.mxu0 0
      %642 = vmatmul.mubr.bf16.gmra.mrb[0].mxu0 %v607
      %v643 = vpop.f32.mrb[0].mxu0
      %v644 = vadd.f32 0.0, %v643
      %v645 = vpop.f32.mrb[0].mxu0
      %v646 = vpop.f32.mrb[0].mxu0
      %v647 = vpop.f32.mrb[0].mxu0
      %648 = vdwg.mxu0
      %v649 = vadd.f32 %v585, %v644
      %v650 = vld [vmem:[%s3] sm:$0x1]
      %v652 = vlaneseq
      %v653 = vshrl.u32 %v652, 7
      %v654 = vsub.s32 0, %v653
      %v655 = vrot.slane %v650, %v654
      %v657 = vadd.f32 %v649, %v655
      %v658 = vld [vmem:[%s4] sm:$0x1]
      %v660 = vlaneseq
      %v661 = vshrl.u32 %v660, 7
      %v662 = vsub.s32 0, %v661
      %v663 = vrot.slane %v658, %v662
      %v665 = vmul.f32 %v657, %v663
      %v666 = vld [vmem:[%s5] sm:$0x1]
      %v668 = vlaneseq
      %v669 = vshrl.u32 %v668, 7
      %v670 = vsub.s32 0, %v669
      %v671 = vrot.slane %v666, %v670
      %v673 = vadd.f32 %v665, %v671
      %vm674 = vcmp.gt.f32.partialorder %v673, 0.0
      %v675 = vmul.f32 %v673, 0.1
      %v676 = vsel %vm674, %v673, %v675
      %v677 = vpack.c.bf16 %v676, %v676
      %v678 = vld [vmem:[%s6] sm:$0xf]
      %v679 = vld [vmem:[%s6 + $0x4] sm:$0xf]
      %v680 = vld [vmem:[%s6 + $0x8] sm:$0x3]
      %v684 = vunpack.c.l.b16 %v678
      %v685 = vunpack.c.l.b16 %v679
      %v686 = vunpack.c.l.b16 %v680
      %v687 = vpack.c.b16 %v685, %v684
      %v688 = vpack.c.b16 %v686, %v686
      %vm689 = vcmask 64512
      %v691 = vsel %vm689, %v687, 0
      %v694 = vsel %vm689, %v688, 0
      %vm696 = vcmask 1043456
      %v698 = vsel %vm696, %v677, 0
      %700 = vmatprep.subr.bf16.mxu0 0
      %701 = vmatpush1.bf16.msra.mxu0 %v698
      %702 = vmatprep.subr.bf16.mxu0 0
      %703 = vmatpush1.bf16.msra.mxu0 0
      %704 = vmatprep.subr.bf16.mxu0 0
      %705 = vmatpush1.bf16.msra.mxu0 0
      %706 = vmatprep.subr.bf16.mxu0 0
      %707 = vmatpush1.bf16.msra.mxu0 0
      %708 = vmatprep.subr.bf16.mxu0 0
      %709 = vmatpush1.bf16.msra.mxu0 0
      %710 = vmatprep.subr.bf16.mxu0 0
      %711 = vmatpush1.bf16.msra.mxu0 0
      %712 = vmatprep.subr.bf16.mxu0 0
      %713 = vmatpush1.bf16.msra.mxu0 0
      %714 = vmatprep.subr.bf16.mxu0 0
      %715 = vmatpush1.bf16.msra.mxu0 0
      %716 = vmatprep.subr.bf16.mxu0 0
      %717 = vmatpush1.bf16.msra.mxu0 0
      %718 = vmatprep.subr.bf16.mxu0 0
      %719 = vmatpush1.bf16.msra.mxu0 0
      %720 = vmatprep.subr.bf16.mxu0 0
      %721 = vmatpush1.bf16.msra.mxu0 0
      %722 = vmatprep.subr.bf16.mxu0 0
      %723 = vmatpush1.bf16.msra.mxu0 0
      %724 = vmatprep.subr.bf16.mxu0 0
      %725 = vmatpush1.bf16.msra.mxu0 0
      %726 = vmatprep.subr.bf16.mxu0 0
      %727 = vmatpush1.bf16.msra.mxu0 0
      %728 = vmatprep.subr.bf16.mxu0 0
      %729 = vmatpush1.bf16.msra.mxu0 0
      %730 = vmatprep.subr.bf16.mxu0 0
      %731 = vmatpush1.bf16.msra.mxu0 0
      %732 = vmatprep.mubr.bf16.mxu0 0
      %733 = vmatmul.mubr.bf16.gmra.mrb[0].mxu0 %v691
      %v734 = vpop.f32.mrb[0].mxu0
      %v735 = vadd.f32 0.0, %v734
      %v736 = vpop.f32.mrb[0].mxu0
      %v737 = vpop.f32.mrb[0].mxu0
      %v738 = vadd.f32 0.0, %v737
      %v739 = vpop.f32.mrb[0].mxu0
      %740 = vmatprep.mubr.bf16.mxu0 0
      %741 = vmatmul.mubr.bf16.gmra.mrb[0].mxu0 %v694
      %v742 = vpop.f32.mrb[0].mxu0
      %v743 = vadd.f32 0.0, %v742
      %v744 = vpop.f32.mrb[0].mxu0
      %v745 = vpop.f32.mrb[0].mxu0
      %v746 = vpop.f32.mrb[0].mxu0
      %747 = vdwg.mxu0
      %v748 = vpack.c.bf16 %v738, %v735
      %v749 = vpack.c.bf16 %v743, %v743
      %v750 = vld [vmem:[%s7] sm:$0xf]
      %v751 = vld [vmem:[%s7 + $0x4] sm:$0xf]
      %s752 = scalar_lea.vmem %s7, 8
      %v753 = vld [vmem:[%s752] sm:$0xf]
      %v754 = vld [vmem:[%s752 + $0x4] sm:$0xf]
      %vm755 = vsmask.f32 7424
      %v757 = vshrl.u32 %v748, 16
      %v759 = vshll.u32 %v748, 16
      %v761 = vrot.slane %v759, 1
      %v762 = vor.u32 %v757, %v761
      %v764 = vshll.u32 %v749, 16
      %v766 = vrot.slane %v764, 1
      %v767 = vsel %vm755, %v762, %v766
      %v770 = vunpack.c.l.b16 %v753
      %v771 = vunpack.c.l.b16 %v754
      %v772 = vpack.c.b16 %v771, %v770
      %vm774 = vcmask 130048
      %v776 = vsel %vm774, %v767, 0
      %778 = vmatprep.subr.bf16.mxu0 0
      %779 = vmatpush1.bf16.msra.mxu0 %v772
      %780 = vmatprep.subr.bf16.mxu0 0
      %781 = vmatpush1.bf16.msra.mxu0 0
      %782 = vmatprep.subr.bf16.mxu0 0
      %783 = vmatpush1.bf16.msra.mxu0 0
      %784 = vmatprep.subr.bf16.mxu0 0
      %785 = vmatpush1.bf16.msra.mxu0 0
      %786 = vmatprep.subr.bf16.mxu0 0
      %787 = vmatpush1.bf16.msra.mxu0 0
      %788 = vmatprep.subr.bf16.mxu0 0
      %789 = vmatpush1.bf16.msra.mxu0 0
      %790 = vmatprep.subr.bf16.mxu0 0
      %791 = vmatpush1.bf16.msra.mxu0 0
      %792 = vmatprep.subr.bf16.mxu0 0
      %793 = vmatpush1.bf16.msra.mxu0 0
      %794 = vmatprep.subr.bf16.mxu0 0
      %795 = vmatpush1.bf16.msra.mxu0 0
      %796 = vmatprep.subr.bf16.mxu0 0
      %797 = vmatpush1.bf16.msra.mxu0 0
      %798 = vmatprep.subr.bf16.mxu0 0
      %799 = vmatpush1.bf16.msra.mxu0 0
      %800 = vmatprep.subr.bf16.mxu0 0
      %801 = vmatpush1.bf16.msra.mxu0 0
      %802 = vmatprep.subr.bf16.mxu0 0
      %803 = vmatpush1.bf16.msra.mxu0 0
      %804 = vmatprep.subr.bf16.mxu0 0
      %805 = vmatpush1.bf16.msra.mxu0 0
      %806 = vmatprep.subr.bf16.mxu0 0
      %807 = vmatpush1.bf16.msra.mxu0 0
      %808 = vmatprep.subr.bf16.mxu0 0
      %809 = vmatpush1.bf16.msra.mxu0 0
      %810 = vmatprep.mubr.bf16.mxu0 0
      %811 = vmatmul.mubr.bf16.gmra.mrb[0].mxu0 %v776
      %v812 = vpop.f32.mrb[0].mxu0
      %v813 = vadd.f32 0.0, %v812
      %v814 = vpop.f32.mrb[0].mxu0
      %v815 = vpop.f32.mrb[0].mxu0
      %v816 = vadd.f32 0.0, %v815
      %v817 = vpop.f32.mrb[0].mxu0
      %818 = vdwg.mxu0
      %v821 = vunpack.c.l.b16 %v750
      %v822 = vunpack.c.l.b16 %v751
      %v823 = vpack.c.b16 %v822, %v821
      %v825 = vsel %vm774, %v748, 0
      %827 = vmatprep.subr.bf16.mxu0 0
      %828 = vmatpush1.bf16.msra.mxu0 %v823
      %829 = vmatprep.subr.bf16.mxu0 0
      %830 = vmatpush1.bf16.msra.mxu0 0
      %831 = vmatprep.subr.bf16.mxu0 0
      %832 = vmatpush1.bf16.msra.mxu0 0
      %833 = vmatprep.subr.bf16.mxu0 0
      %834 = vmatpush1.bf16.msra.mxu0 0
      %835 = vmatprep.subr.bf16.mxu0 0
      %836 = vmatpush1.bf16.msra.mxu0 0
      %837 = vmatprep.subr.bf16.mxu0 0
      %838 = vmatpush1.bf16.msra.mxu0 0
      %839 = vmatprep.subr.bf16.mxu0 0
      %840 = vmatpush1.bf16.msra.mxu0 0
      %841 = vmatprep.subr.bf16.mxu0 0
      %842 = vmatpush1.bf16.msra.mxu0 0
      %843 = vmatprep.subr.bf16.mxu0 0
      %844 = vmatpush1.bf16.msra.mxu0 0
      %845 = vmatprep.subr.bf16.mxu0 0
      %846 = vmatpush1.bf16.msra.mxu0 0
      %847 = vmatprep.subr.bf16.mxu0 0
      %848 = vmatpush1.bf16.msra.mxu0 0
      %849 = vmatprep.subr.bf16.mxu0 0
      %850 = vmatpush1.bf16.msra.mxu0 0
      %851 = vmatprep.subr.bf16.mxu0 0
      %852 = vmatpush1.bf16.msra.mxu0 0
      %853 = vmatprep.subr.bf16.mxu0 0
      %854 = vmatpush1.bf16.msra.mxu0 0
      %855 = vmatprep.subr.bf16.mxu0 0
      %856 = vmatpush1.bf16.msra.mxu0 0
      %857 = vmatprep.subr.bf16.mxu0 0
      %858 = vmatpush1.bf16.msra.mxu0 0
      %859 = vmatprep.mubr.bf16.mxu0 0
      %860 = vmatmul.mubr.bf16.gmra.mrb[0].mxu0 %v825
      %v861 = vpop.f32.mrb[0].mxu0
      %v862 = vadd.f32 %v813, %v861
      %v863 = vpop.f32.mrb[0].mxu0
      %v864 = vpop.f32.mrb[0].mxu0
      %v865 = vadd.f32 %v816, %v864
      %v866 = vpop.f32.mrb[0].mxu0
      %867 = vdwg.mxu0
      %s868 = scalar_lea.vmem %s7, 16
      %v869 = vld [vmem:[%s868] sm:$0xf]
      %v870 = vld [vmem:[%s868 + $0x4] sm:$0xf]
      %vm873 = vcmask 1046528
      %v874 = vrot.slane %v748, 1
      %v875 = vrot.slane %v749, 1
      %v876 = vsel %vm873, %v874, %v875
      %v879 = vunpack.c.l.b16 %v869
      %v880 = vunpack.c.l.b16 %v870
      %v881 = vpack.c.b16 %v880, %v879
      %v884 = vsel %vm774, %v876, 0
      %886 = vmatprep.subr.bf16.mxu0 0
      %887 = vmatpush1.bf16.msra.mxu0 %v881
      %888 = vmatprep.subr.bf16.mxu0 0
      %889 = vmatpush1.bf16.msra.mxu0 0
      %890 = vmatprep.subr.bf16.mxu0 0
      %891 = vmatpush1.bf16.msra.mxu0 0
      %892 = vmatprep.subr.bf16.mxu0 0
      %893 = vmatpush1.bf16.msra.mxu0 0
      %894 = vmatprep.subr.bf16.mxu0 0
      %895 = vmatpush1.bf16.msra.mxu0 0
      %896 = vmatprep.subr.bf16.mxu0 0
      %897 = vmatpush1.bf16.msra.mxu0 0
      %898 = vmatprep.subr.bf16.mxu0 0
      %899 = vmatpush1.bf16.msra.mxu0 0
      %900 = vmatprep.subr.bf16.mxu0 0
      %901 = vmatpush1.bf16.msra.mxu0 0
      %902 = vmatprep.subr.bf16.mxu0 0
      %903 = vmatpush1.bf16.msra.mxu0 0
      %904 = vmatprep.subr.bf16.mxu0 0
      %905 = vmatpush1.bf16.msra.mxu0 0
      %906 = vmatprep.subr.bf16.mxu0 0
      %907 = vmatpush1.bf16.msra.mxu0 0
      %908 = vmatprep.subr.bf16.mxu0 0
      %909 = vmatpush1.bf16.msra.mxu0 0
      %910 = vmatprep.subr.bf16.mxu0 0
      %911 = vmatpush1.bf16.msra.mxu0 0
      %912 = vmatprep.subr.bf16.mxu0 0
      %913 = vmatpush1.bf16.msra.mxu0 0
      %914 = vmatprep.subr.bf16.mxu0 0
      %915 = vmatpush1.bf16.msra.mxu0 0
      %916 = vmatprep.subr.bf16.mxu0 0
      %917 = vmatpush1.bf16.msra.mxu0 0
      %918 = vmatprep.mubr.bf16.mxu0 0
      %919 = vmatmul.mubr.bf16.gmra.mrb[0].mxu0 %v884
      %v920 = vpop.f32.mrb[0].mxu0
      %v921 = vadd.f32 0.0, %v920
      %v922 = vpop.f32.mrb[0].mxu0
      %v923 = vpop.f32.mrb[0].mxu0
      %v924 = vadd.f32 0.0, %v923
      %v925 = vpop.f32.mrb[0].mxu0
      %926 = vdwg.mxu0
      %v927 = vadd.f32 %v862, %v921
      %v928 = vadd.f32 %v865, %v924
      %s929 = scalar_lea.vmem %s7, 24
      %v930 = vld [vmem:[%s929] sm:$0xf]
      %v931 = vld [vmem:[%s929 + $0x4] sm:$0xf]
      %vm932 = vsmask.f32 6400
      %v933 = vrot.slane %v757, 1
      %v934 = vrot.slane %v759, 2
      %v935 = vor.u32 %v933, %v934
      %v936 = vshrl.u32 %v749, 16
      %v938 = vrot.slane %v936, 1
      %v939 = vrot.slane %v764, 2
      %v940 = vor.u32 %v938, %v939
      %v941 = vsel %vm932, %v935, %v940
      %v944 = vunpack.c.l.b16 %v930
      %v945 = vunpack.c.l.b16 %v931
      %v946 = vpack.c.b16 %v945, %v944
      %v949 = vsel %vm774, %v941, 0
      %951 = vmatprep.subr.bf16.mxu0 0
      %952 = vmatpush1.bf16.msra.mxu0 %v946
      %953 = vmatprep.subr.bf16.mxu0 0
      %954 = vmatpush1.bf16.msra.mxu0 0
      %955 = vmatprep.subr.bf16.mxu0 0
      %956 = vmatpush1.bf16.msra.mxu0 0
      %957 = vmatprep.subr.bf16.mxu0 0
      %958 = vmatpush1.bf16.msra.mxu0 0
      %959 = vmatprep.subr.bf16.mxu0 0
      %960 = vmatpush1.bf16.msra.mxu0 0
      %961 = vmatprep.subr.bf16.mxu0 0
      %962 = vmatpush1.bf16.msra.mxu0 0
      %963 = vmatprep.subr.bf16.mxu0 0
      %964 = vmatpush1.bf16.msra.mxu0 0
      %965 = vmatprep.subr.bf16.mxu0 0
      %966 = vmatpush1.bf16.msra.mxu0 0
      %967 = vmatprep.subr.bf16.mxu0 0
      %968 = vmatpush1.bf16.msra.mxu0 0
      %969 = vmatprep.subr.bf16.mxu0 0
      %970 = vmatpush1.bf16.msra.mxu0 0
      %971 = vmatprep.subr.bf16.mxu0 0
      %972 = vmatpush1.bf16.msra.mxu0 0
      %973 = vmatprep.subr.bf16.mxu0 0
      %974 = vmatpush1.bf16.msra.mxu0 0
      %975 = vmatprep.subr.bf16.mxu0 0
      %976 = vmatpush1.bf16.msra.mxu0 0
      %977 = vmatprep.subr.bf16.mxu0 0
      %978 = vmatpush1.bf16.msra.mxu0 0
      %979 = vmatprep.subr.bf16.mxu0 0
      %980 = vmatpush1.bf16.msra.mxu0 0
      %981 = vmatprep.subr.bf16.mxu0 0
      %982 = vmatpush1.bf16.msra.mxu0 0
      %983 = vmatprep.mubr.bf16.mxu0 0
      %984 = vmatmul.mubr.bf16.gmra.mrb[0].mxu0 %v949
      %v985 = vpop.f32.mrb[0].mxu0
      %v986 = vadd.f32 0.0, %v985
      %v987 = vpop.f32.mrb[0].mxu0
      %v988 = vpop.f32.mrb[0].mxu0
      %v989 = vadd.f32 0.0, %v988
      %v990 = vpop.f32.mrb[0].mxu0
      %991 = vdwg.mxu0
      %v992 = vadd.f32 %v927, %v986
      %v993 = vadd.f32 %v928, %v989
      %v994 = vld [vmem:[%s8] sm:$0x1]
      %v996 = vlaneseq
      %v997 = vshrl.u32 %v996, 7
      %v998 = vsub.s32 0, %v997
      %v999 = vrot.slane %v994, %v998
      %v1001 = vadd.f32 %v992, %v999
      %v1002 = vadd.f32 %v993, %v999
      %1003 = vst.msk [vmem:[%s336] sm:$0xff] %vm689, %v1001
      %1004 = vst.msk [vmem:[%s336 + $0x8] sm:$0xff] %vm689, %v1002
      %s1005 = scalar_lea.vmem %s329, 2
      %v1006 = vld [vmem:[%s1005] sm:$0x3]
      %v1007 = vld [vmem:[%s1] sm:$0xf]
      %v1008 = vld [vmem:[%s1 + $0x4] sm:$0x3]
      %v1011 = vunpack.c.l.b16 %v1007
      %v1012 = vunpack.c.l.b16 %v1008
      %v1013 = vpack.c.b16 %v1012, %v1011
      %v1015 = vsel %vm347, %v1013, 0
      %v1018 = vsel %vm351, %v1006, 0
      %1020 = vmatprep.subr.bf16.mxu0 0
      %1021 = vmatpush1.bf16.msra.mxu0 %v1018
      %1022 = vmatprep.subr.bf16.mxu0 0
      %1023 = vmatpush1.bf16.msra.mxu0 0
      %1024 = vmatprep.subr.bf16.mxu0 0
      %1025 = vmatpush1.bf16.msra.mxu0 0
      %1026 = vmatprep.subr.bf16.mxu0 0
      %1027 = vmatpush1.bf16.msra.mxu0 0
      %1028 = vmatprep.subr.bf16.mxu0 0
      %1029 = vmatpush1.bf16.msra.mxu0 0
      %1030 = vmatprep.subr.bf16.mxu0 0
      %1031 = vmatpush1.bf16.msra.mxu0 0
      %1032 = vmatprep.subr.bf16.mxu0 0
      %1033 = vmatpush1.bf16.msra.mxu0 0
      %1034 = vmatprep.subr.bf16.mxu0 0
      %1035 = vmatpush1.bf16.msra.mxu0 0
      %1036 = vmatprep.subr.bf16.mxu0 0
      %1037 = vmatpush1.bf16.msra.mxu0 0
      %1038 = vmatprep.subr.bf16.mxu0 0
      %1039 = vmatpush1.bf16.msra.mxu0 0
      %1040 = vmatprep.subr.bf16.mxu0 0
      %1041 = vmatpush1.bf16.msra.mxu0 0
      %1042 = vmatprep.subr.bf16.mxu0 0
      %1043 = vmatpush1.bf16.msra.mxu0 0
      %1044 = vmatprep.subr.bf16.mxu0 0
      %1045 = vmatpush1.bf16.msra.mxu0 0
      %1046 = vmatprep.subr.bf16.mxu0 0
      %1047 = vmatpush1.bf16.msra.mxu0 0
      %1048 = vmatprep.subr.bf16.mxu0 0
      %1049 = vmatpush1.bf16.msra.mxu0 0
      %1050 = vmatprep.subr.bf16.mxu0 0
      %1051 = vmatpush1.bf16.msra.mxu0 0
      %1052 = vmatprep.mubr.bf16.mxu0 0
      %1053 = vmatmul.mubr.bf16.gmra.mrb[0].mxu0 %v1015
      %v1054 = vpop.f32.mrb[0].mxu0
      %v1055 = vadd.f32 0.0, %v1054
      %v1056 = vpop.f32.mrb[0].mxu0
      %v1057 = vpop.f32.mrb[0].mxu0
      %v1058 = vadd.f32 0.0, %v1057
      %v1059 = vpop.f32.mrb[0].mxu0
      %1060 = vdwg.mxu0
      %v1061 = vpack.c.bf16 %v1058, %v1055
      %v1062 = vld [vmem:[%s2] sm:$0xf]
      %v1063 = vld [vmem:[%s2 + $0x4] sm:$0xf]
      %v1064 = vld [vmem:[%s2 + $0x8] sm:$0xf]
      %v1065 = vld [vmem:[%s2 + $0xc] sm:$0xf]
      %v1066 = vld [vmem:[%s401] sm:$0xf]
      %v1067 = vld [vmem:[%s401 + $0x4] sm:$0xf]
      %v1068 = vld [vmem:[%s401 + $0x8] sm:$0xf]
      %v1069 = vld [vmem:[%s401 + $0xc] sm:$0xf]
      %v1071 = vshrl.u32 %v1061, 16
      %v1073 = vshll.u32 %v1061, 16
      %v1075 = vrot.slane %v1073, 1
      %v1076 = vor.u32 %v1071, %v1075
      %v1081 = vunpack.c.l.b16 %v1066
      %v1082 = vunpack.c.l.b16 %v1067
      %v1083 = vunpack.c.l.b16 %v1068
      %v1084 = vunpack.c.l.b16 %v1069
      %v1085 = vpack.c.b16 %v1082, %v1081
      %v1086 = vpack.c.b16 %v1084, %v1083
      %v1090 = vsel %vm425, %v1076, 0
      %1092 = vmatprep.subr.bf16.mxu0 0
      %1093 = vmatpush1.bf16.msra.mxu0 %v1085
      %1094 = vmatprep.subr.bf16.mxu0 0
      %1095 = vmatpush1.bf16.msra.mxu0 %v1086
      %1096 = vmatprep.subr.bf16.mxu0 0
      %1097 = vmatpush1.bf16.msra.mxu0 0
      %1098 = vmatprep.subr.bf16.mxu0 0
      %1099 = vmatpush1.bf16.msra.mxu0 0
      %1100 = vmatprep.subr.bf16.mxu0 0
      %1101 = vmatpush1.bf16.msra.mxu0 0
      %1102 = vmatprep.subr.bf16.mxu0 0
      %1103 = vmatpush1.bf16.msra.mxu0 0
      %1104 = vmatprep.subr.bf16.mxu0 0
      %1105 = vmatpush1.bf16.msra.mxu0 0
      %1106 = vmatprep.subr.bf16.mxu0 0
      %1107 = vmatpush1.bf16.msra.mxu0 0
      %1108 = vmatprep.subr.bf16.mxu0 0
      %1109 = vmatpush1.bf16.msra.mxu0 0
      %1110 = vmatprep.subr.bf16.mxu0 0
      %1111 = vmatpush1.bf16.msra.mxu0 0
      %1112 = vmatprep.subr.bf16.mxu0 0
      %1113 = vmatpush1.bf16.msra.mxu0 0
      %1114 = vmatprep.subr.bf16.mxu0 0
      %1115 = vmatpush1.bf16.msra.mxu0 0
      %1116 = vmatprep.subr.bf16.mxu0 0
      %1117 = vmatpush1.bf16.msra.mxu0 0
      %1118 = vmatprep.subr.bf16.mxu0 0
      %1119 = vmatpush1.bf16.msra.mxu0 0
      %1120 = vmatprep.subr.bf16.mxu0 0
      %1121 = vmatpush1.bf16.msra.mxu0 0
      %1122 = vmatprep.subr.bf16.mxu0 0
      %1123 = vmatpush1.bf16.msra.mxu0 0
      %1124 = vmatprep.mubr.bf16.mxu0 0
      %1125 = vmatmul.mubr.bf16.gmra.mrb[0].mxu0 %v1090
      %v1126 = vpop.f32.mrb[0].mxu0
      %v1127 = vadd.f32 0.0, %v1126
      %v1128 = vpop.f32.mrb[0].mxu0
      %v1129 = vpop.f32.mrb[0].mxu0
      %v1130 = vpop.f32.mrb[0].mxu0
      %1131 = vdwg.mxu0
      %v1136 = vunpack.c.l.b16 %v1062
      %v1137 = vunpack.c.l.b16 %v1063
      %v1138 = vunpack.c.l.b16 %v1064
      %v1139 = vunpack.c.l.b16 %v1065
      %v1140 = vpack.c.b16 %v1137, %v1136
      %v1141 = vpack.c.b16 %v1139, %v1138
      %v1144 = vsel %vm425, %v1061, 0
      %1146 = vmatprep.subr.bf16.mxu0 0
      %1147 = vmatpush1.bf16.msra.mxu0 %v1140
      %1148 = vmatprep.subr.bf16.mxu0 0
      %1149 = vmatpush1.bf16.msra.mxu0 %v1141
      %1150 = vmatprep.subr.bf16.mxu0 0
      %1151 = vmatpush1.bf16.msra.mxu0 0
      %1152 = vmatprep.subr.bf16.mxu0 0
      %1153 = vmatpush1.bf16.msra.mxu0 0
      %1154 = vmatprep.subr.bf16.mxu0 0
      %1155 = vmatpush1.bf16.msra.mxu0 0
      %1156 = vmatprep.subr.bf16.mxu0 0
      %1157 = vmatpush1.bf16.msra.mxu0 0
      %1158 = vmatprep.subr.bf16.mxu0 0
      %1159 = vmatpush1.bf16.msra.mxu0 0
      %1160 = vmatprep.subr.bf16.mxu0 0
      %1161 = vmatpush1.bf16.msra.mxu0 0
      %1162 = vmatprep.subr.bf16.mxu0 0
      %1163 = vmatpush1.bf16.msra.mxu0 0
      %1164 = vmatprep.subr.bf16.mxu0 0
      %1165 = vmatpush1.bf16.msra.mxu0 0
      %1166 = vmatprep.subr.bf16.mxu0 0
      %1167 = vmatpush1.bf16.msra.mxu0 0
      %1168 = vmatprep.subr.bf16.mxu0 0
      %1169 = vmatpush1.bf16.msra.mxu0 0
      %1170 = vmatprep.subr.bf16.mxu0 0
      %1171 = vmatpush1.bf16.msra.mxu0 0
      %1172 = vmatprep.subr.bf16.mxu0 0
      %1173 = vmatpush1.bf16.msra.mxu0 0
      %1174 = vmatprep.subr.bf16.mxu0 0
      %1175 = vmatpush1.bf16.msra.mxu0 0
      %1176 = vmatprep.subr.bf16.mxu0 0
      %1177 = vmatpush1.bf16.msra.mxu0 0
      %1178 = vmatprep.mubr.bf16.mxu0 0
      %1179 = vmatmul.mubr.bf16.gmra.mrb[0].mxu0 %v1144
      %v1180 = vpop.f32.mrb[0].mxu0
      %v1181 = vadd.f32 %v1127, %v1180
      %v1182 = vpop.f32.mrb[0].mxu0
      %v1183 = vpop.f32.mrb[0].mxu0
      %v1184 = vpop.f32.mrb[0].mxu0
      %1185 = vdwg.mxu0
      %v1186 = vld [vmem:[%s523] sm:$0xf]
      %v1187 = vld [vmem:[%s523 + $0x4] sm:$0xf]
      %v1188 = vld [vmem:[%s523 + $0x8] sm:$0xf]
      %v1189 = vld [vmem:[%s523 + $0xc] sm:$0xf]
      %v1191 = vrot.slane %v1061, 1
      %v1196 = vunpack.c.l.b16 %v1186
      %v1197 = vunpack.c.l.b16 %v1187
      %v1198 = vunpack.c.l.b16 %v1188
      %v1199 = vunpack.c.l.b16 %v1189
      %v1200 = vpack.c.b16 %v1197, %v1196
      %v1201 = vpack.c.b16 %v1199, %v1198
      %v1205 = vsel %vm425, %v1191, 0
      %1207 = vmatprep.subr.bf16.mxu0 0
      %1208 = vmatpush1.bf16.msra.mxu0 %v1200
      %1209 = vmatprep.subr.bf16.mxu0 0
      %1210 = vmatpush1.bf16.msra.mxu0 %v1201
      %1211 = vmatprep.subr.bf16.mxu0 0
      %1212 = vmatpush1.bf16.msra.mxu0 0
      %1213 = vmatprep.subr.bf16.mxu0 0
      %1214 = vmatpush1.bf16.msra.mxu0 0
      %1215 = vmatprep.subr.bf16.mxu0 0
      %1216 = vmatpush1.bf16.msra.mxu0 0
      %1217 = vmatprep.subr.bf16.mxu0 0
      %1218 = vmatpush1.bf16.msra.mxu0 0
      %1219 = vmatprep.subr.bf16.mxu0 0
      %1220 = vmatpush1.bf16.msra.mxu0 0
      %1221 = vmatprep.subr.bf16.mxu0 0
      %1222 = vmatpush1.bf16.msra.mxu0 0
      %1223 = vmatprep.subr.bf16.mxu0 0
      %1224 = vmatpush1.bf16.msra.mxu0 0
      %1225 = vmatprep.subr.bf16.mxu0 0
      %1226 = vmatpush1.bf16.msra.mxu0 0
      %1227 = vmatprep.subr.bf16.mxu0 0
      %1228 = vmatpush1.bf16.msra.mxu0 0
      %1229 = vmatprep.subr.bf16.mxu0 0
      %1230 = vmatpush1.bf16.msra.mxu0 0
      %1231 = vmatprep.subr.bf16.mxu0 0
      %1232 = vmatpush1.bf16.msra.mxu0 0
      %1233 = vmatprep.subr.bf16.mxu0 0
      %1234 = vmatpush1.bf16.msra.mxu0 0
      %1235 = vmatprep.subr.bf16.mxu0 0
      %1236 = vmatpush1.bf16.msra.mxu0 0
      %1237 = vmatprep.subr.bf16.mxu0 0
      %1238 = vmatpush1.bf16.msra.mxu0 0
      %1239 = vmatprep.mubr.bf16.mxu0 0
      %1240 = vmatmul.mubr.bf16.gmra.mrb[0].mxu0 %v1205
      %v1241 = vpop.f32.mrb[0].mxu0
      %v1242 = vadd.f32 0.0, %v1241
      %v1243 = vpop.f32.mrb[0].mxu0
      %v1244 = vpop.f32.mrb[0].mxu0
      %v1245 = vpop.f32.mrb[0].mxu0
      %1246 = vdwg.mxu0
      %v1247 = vadd.f32 %v1181, %v1242
      %v1248 = vld [vmem:[%s586] sm:$0xf]
      %v1249 = vld [vmem:[%s586 + $0x4] sm:$0xf]
      %v1250 = vld [vmem:[%s586 + $0x8] sm:$0xf]
      %v1251 = vld [vmem:[%s586 + $0xc] sm:$0xf]
      %v1252 = vrot.slane %v1071, 1
      %v1253 = vrot.slane %v1073, 2
      %v1254 = vor.u32 %v1252, %v1253
      %v1259 = vunpack.c.l.b16 %v1248
      %v1260 = vunpack.c.l.b16 %v1249
      %v1261 = vunpack.c.l.b16 %v1250
      %v1262 = vunpack.c.l.b16 %v1251
      %v1263 = vpack.c.b16 %v1260, %v1259
      %v1264 = vpack.c.b16 %v1262, %v1261
      %v1268 = vsel %vm425, %v1254, 0
      %1270 = vmatprep.subr.bf16.mxu0 0
      %1271 = vmatpush1.bf16.msra.mxu0 %v1263
      %1272 = vmatprep.subr.bf16.mxu0 0
      %1273 = vmatpush1.bf16.msra.mxu0 %v1264
      %1274 = vmatprep.subr.bf16.mxu0 0
      %1275 = vmatpush1.bf16.msra.mxu0 0
      %1276 = vmatprep.subr.bf16.mxu0 0
      %1277 = vmatpush1.bf16.msra.mxu0 0
      %1278 = vmatprep.subr.bf16.mxu0 0
      %1279 = vmatpush1.bf16.msra.mxu0 0
      %1280 = vmatprep.subr.bf16.mxu0 0
      %1281 = vmatpush1.bf16.msra.mxu0 0
      %1282 = vmatprep.subr.bf16.mxu0 0
      %1283 = vmatpush1.bf16.msra.mxu0 0
      %1284 = vmatprep.subr.bf16.mxu0 0
      %1285 = vmatpush1.bf16.msra.mxu0 0
      %1286 = vmatprep.subr.bf16.mxu0 0
      %1287 = vmatpush1.bf16.msra.mxu0 0
      %1288 = vmatprep.subr.bf16.mxu0 0
      %1289 = vmatpush1.bf16.msra.mxu0 0
      %1290 = vmatprep.subr.bf16.mxu0 0
      %1291 = vmatpush1.bf16.msra.mxu0 0
      %1292 = vmatprep.subr.bf16.mxu0 0
      %1293 = vmatpush1.bf16.msra.mxu0 0
      %1294 = vmatprep.subr.bf16.mxu0 0
      %1295 = vmatpush1.bf16.msra.mxu0 0
      %1296 = vmatprep.subr.bf16.mxu0 0
      %1297 = vmatpush1.bf16.msra.mxu0 0
      %1298 = vmatprep.subr.bf16.mxu0 0
      %1299 = vmatpush1.bf16.msra.mxu0 0
      %1300 = vmatprep.subr.bf16.mxu0 0
      %1301 = vmatpush1.bf16.msra.mxu0 0
      %1302 = vmatprep.mubr.bf16.mxu0 0
      %1303 = vmatmul.mubr.bf16.gmra.mrb[0].mxu0 %v1268
      %v1304 = vpop.f32.mrb[0].mxu0
      %v1305 = vadd.f32 0.0, %v1304
      %v1306 = vpop.f32.mrb[0].mxu0
      %v1307 = vpop.f32.mrb[0].mxu0
      %v1308 = vpop.f32.mrb[0].mxu0
      %1309 = vdwg.mxu0
      %v1310 = vadd.f32 %v1247, %v1305
      %v1311 = vld [vmem:[%s3] sm:$0x1]
      %v1313 = vlaneseq
      %v1314 = vshrl.u32 %v1313, 7
      %v1315 = vsub.s32 0, %v1314
      %v1316 = vrot.slane %v1311, %v1315
      %v1318 = vadd.f32 %v1310, %v1316
      %v1319 = vld [vmem:[%s4] sm:$0x1]
      %v1321 = vlaneseq
      %v1322 = vshrl.u32 %v1321, 7
      %v1323 = vsub.s32 0, %v1322
      %v1324 = vrot.slane %v1319, %v1323
      %v1326 = vmul.f32 %v1318, %v1324
      %v1327 = vld [vmem:[%s5] sm:$0x1]
      %v1329 = vlaneseq
      %v1330 = vshrl.u32 %v1329, 7
      %v1331 = vsub.s32 0, %v1330
      %v1332 = vrot.slane %v1327, %v1331
      %v1334 = vadd.f32 %v1326, %v1332
      %vm1335 = vcmp.gt.f32.partialorder %v1334, 0.0
      %v1336 = vmul.f32 %v1334, 0.1
      %v1337 = vsel %vm1335, %v1334, %v1336
      %v1338 = vpack.c.bf16 %v1337, %v1337
      %v1339 = vld [vmem:[%s6] sm:$0xf]
      %v1340 = vld [vmem:[%s6 + $0x4] sm:$0xf]
      %v1341 = vld [vmem:[%s6 + $0x8] sm:$0x3]
      %v1345 = vunpack.c.l.b16 %v1339
      %v1346 = vunpack.c.l.b16 %v1340
      %v1347 = vunpack.c.l.b16 %v1341
      %v1348 = vpack.c.b16 %v1346, %v1345
      %v1349 = vpack.c.b16 %v1347, %v1347
      %v1351 = vsel %vm689, %v1348, 0
      %v1354 = vsel %vm689, %v1349, 0
      %v1357 = vsel %vm696, %v1338, 0
      %1359 = vmatprep.subr.bf16.mxu0 0
      %1360 = vmatpush1.bf16.msra.mxu0 %v1357
      %1361 = vmatprep.subr.bf16.mxu0 0
      %1362 = vmatpush1.bf16.msra.mxu0 0
      %1363 = vmatprep.subr.bf16.mxu0 0
      %1364 = vmatpush1.bf16.msra.mxu0 0
      %1365 = vmatprep.subr.bf16.mxu0 0
      %1366 = vmatpush1.bf16.msra.mxu0 0
      %1367 = vmatprep.subr.bf16.mxu0 0
      %1368 = vmatpush1.bf16.msra.mxu0 0
      %1369 = vmatprep.subr.bf16.mxu0 0
      %1370 = vmatpush1.bf16.msra.mxu0 0
      %1371 = vmatprep.subr.bf16.mxu0 0
      %1372 = vmatpush1.bf16.msra.mxu0 0
      %1373 = vmatprep.subr.bf16.mxu0 0
      %1374 = vmatpush1.bf16.msra.mxu0 0
      %1375 = vmatprep.subr.bf16.mxu0 0
      %1376 = vmatpush1.bf16.msra.mxu0 0
      %1377 = vmatprep.subr.bf16.mxu0 0
      %1378 = vmatpush1.bf16.msra.mxu0 0
      %1379 = vmatprep.subr.bf16.mxu0 0
      %1380 = vmatpush1.bf16.msra.mxu0 0
      %1381 = vmatprep.subr.bf16.mxu0 0
      %1382 = vmatpush1.bf16.msra.mxu0 0
      %1383 = vmatprep.subr.bf16.mxu0 0
      %1384 = vmatpush1.bf16.msra.mxu0 0
      %1385 = vmatprep.subr.bf16.mxu0 0
      %1386 = vmatpush1.bf16.msra.mxu0 0
      %1387 = vmatprep.subr.bf16.mxu0 0
      %1388 = vmatpush1.bf16.msra.mxu0 0
      %1389 = vmatprep.subr.bf16.mxu0 0
      %1390 = vmatpush1.bf16.msra.mxu0 0
      %1391 = vmatprep.mubr.bf16.mxu0 0
      %1392 = vmatmul.mubr.bf16.gmra.mrb[0].mxu0 %v1351
      %v1393 = vpop.f32.mrb[0].mxu0
      %v1394 = vadd.f32 0.0, %v1393
      %v1395 = vpop.f32.mrb[0].mxu0
      %v1396 = vpop.f32.mrb[0].mxu0
      %v1397 = vadd.f32 0.0, %v1396
      %v1398 = vpop.f32.mrb[0].mxu0
      %1399 = vmatprep.mubr.bf16.mxu0 0
      %1400 = vmatmul.mubr.bf16.gmra.mrb[0].mxu0 %v1354
      %v1401 = vpop.f32.mrb[0].mxu0
      %v1402 = vadd.f32 0.0, %v1401
      %v1403 = vpop.f32.mrb[0].mxu0
      %v1404 = vpop.f32.mrb[0].mxu0
      %v1405 = vpop.f32.mrb[0].mxu0
      %1406 = vdwg.mxu0
      %v1407 = vpack.c.bf16 %v1397, %v1394
      %v1408 = vpack.c.bf16 %v1402, %v1402
      %v1409 = vld [vmem:[%s7] sm:$0xf]
      %v1410 = vld [vmem:[%s7 + $0x4] sm:$0xf]
      %v1411 = vld [vmem:[%s752] sm:$0xf]
      %v1412 = vld [vmem:[%s752 + $0x4] sm:$0xf]
      %v1414 = vshrl.u32 %v1407, 16
      %v1416 = vshll.u32 %v1407, 16
      %v1418 = vrot.slane %v1416, 1
      %v1419 = vor.u32 %v1414, %v1418
      %v1421 = vshll.u32 %v1408, 16
      %v1423 = vrot.slane %v1421, 1
      %v1424 = vsel %vm755, %v1419, %v1423
      %v1427 = vunpack.c.l.b16 %v1411
      %v1428 = vunpack.c.l.b16 %v1412
      %v1429 = vpack.c.b16 %v1428, %v1427
      %v1432 = vsel %vm774, %v1424, 0
      %1434 = vmatprep.subr.bf16.mxu0 0
      %1435 = vmatpush1.bf16.msra.mxu0 %v1429
      %1436 = vmatprep.subr.bf16.mxu0 0
      %1437 = vmatpush1.bf16.msra.mxu0 0
      %1438 = vmatprep.subr.bf16.mxu0 0
      %1439 = vmatpush1.bf16.msra.mxu0 0
      %1440 = vmatprep.subr.bf16.mxu0 0
      %1441 = vmatpush1.bf16.msra.mxu0 0
      %1442 = vmatprep.subr.bf16.mxu0 0
      %1443 = vmatpush1.bf16.msra.mxu0 0
      %1444 = vmatprep.subr.bf16.mxu0 0
      %1445 = vmatpush1.bf16.msra.mxu0 0
      %1446 = vmatprep.subr.bf16.mxu0 0
      %1447 = vmatpush1.bf16.msra.mxu0 0
      %1448 = vmatprep.subr.bf16.mxu0 0
      %1449 = vmatpush1.bf16.msra.mxu0 0
      %1450 = vmatprep.subr.bf16.mxu0 0
      %1451 = vmatpush1.bf16.msra.mxu0 0
      %1452 = vmatprep.subr.bf16.mxu0 0
      %1453 = vmatpush1.bf16.msra.mxu0 0
      %1454 = vmatprep.subr.bf16.mxu0 0
      %1455 = vmatpush1.bf16.msra.mxu0 0
      %1456 = vmatprep.subr.bf16.mxu0 0
      %1457 = vmatpush1.bf16.msra.mxu0 0
      %1458 = vmatprep.subr.bf16.mxu0 0
      %1459 = vmatpush1.bf16.msra.mxu0 0
      %1460 = vmatprep.subr.bf16.mxu0 0
      %1461 = vmatpush1.bf16.msra.mxu0 0
      %1462 = vmatprep.subr.bf16.mxu0 0
      %1463 = vmatpush1.bf16.msra.mxu0 0
      %1464 = vmatprep.subr.bf16.mxu0 0
      %1465 = vmatpush1.bf16.msra.mxu0 0
      %1466 = vmatprep.mubr.bf16.mxu0 0
      %1467 = vmatmul.mubr.bf16.gmra.mrb[0].mxu0 %v1432
      %v1468 = vpop.f32.mrb[0].mxu0
      %v1469 = vadd.f32 0.0, %v1468
      %v1470 = vpop.f32.mrb[0].mxu0
      %v1471 = vpop.f32.mrb[0].mxu0
      %v1472 = vadd.f32 0.0, %v1471
      %v1473 = vpop.f32.mrb[0].mxu0
      %1474 = vdwg.mxu0
      %v1477 = vunpack.c.l.b16 %v1409
      %v1478 = vunpack.c.l.b16 %v1410
      %v1479 = vpack.c.b16 %v1478, %v1477
      %v1481 = vsel %vm774, %v1407, 0
      %1483 = vmatprep.subr.bf16.mxu0 0
      %1484 = vmatpush1.bf16.msra.mxu0 %v1479
      %1485 = vmatprep.subr.bf16.mxu0 0
      %1486 = vmatpush1.bf16.msra.mxu0 0
      %1487 = vmatprep.subr.bf16.mxu0 0
      %1488 = vmatpush1.bf16.msra.mxu0 0
      %1489 = vmatprep.subr.bf16.mxu0 0
      %1490 = vmatpush1.bf16.msra.mxu0 0
      %1491 = vmatprep.subr.bf16.mxu0 0
      %1492 = vmatpush1.bf16.msra.mxu0 0
      %1493 = vmatprep.subr.bf16.mxu0 0
      %1494 = vmatpush1.bf16.msra.mxu0 0
      %1495 = vmatprep.subr.bf16.mxu0 0
      %1496 = vmatpush1.bf16.msra.mxu0 0
      %1497 = vmatprep.subr.bf16.mxu0 0
      %1498 = vmatpush1.bf16.msra.mxu0 0
      %1499 = vmatprep.subr.bf16.mxu0 0
      %1500 = vmatpush1.bf16.msra.mxu0 0
      %1501 = vmatprep.subr.bf16.mxu0 0
      %1502 = vmatpush1.bf16.msra.mxu0 0
      %1503 = vmatprep.subr.bf16.mxu0 0
      %1504 = vmatpush1.bf16.msra.mxu0 0
      %1505 = vmatprep.subr.bf16.mxu0 0
      %1506 = vmatpush1.bf16.msra.mxu0 0
      %1507 = vmatprep.subr.bf16.mxu0 0
      %1508 = vmatpush1.bf16.msra.mxu0 0
      %1509 = vmatprep.subr.bf16.mxu0 0
      %1510 = vmatpush1.bf16.msra.mxu0 0
      %1511 = vmatprep.subr.bf16.mxu0 0
      %1512 = vmatpush1.bf16.msra.mxu0 0
      %1513 = vmatprep.subr.bf16.mxu0 0
      %1514 = vmatpush1.bf16.msra.mxu0 0
      %1515 = vmatprep.mubr.bf16.mxu0 0
      %1516 = vmatmul.mubr.bf16.gmra.mrb[0].mxu0 %v1481
      %v1517 = vpop.f32.mrb[0].mxu0
      %v1518 = vadd.f32 %v1469, %v1517
      %v1519 = vpop.f32.mrb[0].mxu0
      %v1520 = vpop.f32.mrb[0].mxu0
      %v1521 = vadd.f32 %v1472, %v1520
      %v1522 = vpop.f32.mrb[0].mxu0
      %1523 = vdwg.mxu0
      %v1524 = vld [vmem:[%s868] sm:$0xf]
      %v1525 = vld [vmem:[%s868 + $0x4] sm:$0xf]
      %v1528 = vrot.slane %v1407, 1
      %v1529 = vrot.slane %v1408, 1
      %v1530 = vsel %vm873, %v1528, %v1529
      %v1533 = vunpack.c.l.b16 %v1524
      %v1534 = vunpack.c.l.b16 %v1525
      %v1535 = vpack.c.b16 %v1534, %v1533
      %v1538 = vsel %vm774, %v1530, 0
      %1540 = vmatprep.subr.bf16.mxu0 0
      %1541 = vmatpush1.bf16.msra.mxu0 %v1535
      %1542 = vmatprep.subr.bf16.mxu0 0
      %1543 = vmatpush1.bf16.msra.mxu0 0
      %1544 = vmatprep.subr.bf16.mxu0 0
      %1545 = vmatpush1.bf16.msra.mxu0 0
      %1546 = vmatprep.subr.bf16.mxu0 0
      %1547 = vmatpush1.bf16.msra.mxu0 0
      %1548 = vmatprep.subr.bf16.mxu0 0
      %1549 = vmatpush1.bf16.msra.mxu0 0
      %1550 = vmatprep.subr.bf16.mxu0 0
      %1551 = vmatpush1.bf16.msra.mxu0 0
      %1552 = vmatprep.subr.bf16.mxu0 0
      %1553 = vmatpush1.bf16.msra.mxu0 0
      %1554 = vmatprep.subr.bf16.mxu0 0
      %1555 = vmatpush1.bf16.msra.mxu0 0
      %1556 = vmatprep.subr.bf16.mxu0 0
      %1557 = vmatpush1.bf16.msra.mxu0 0
      %1558 = vmatprep.subr.bf16.mxu0 0
      %1559 = vmatpush1.bf16.msra.mxu0 0
      %1560 = vmatprep.subr.bf16.mxu0 0
      %1561 = vmatpush1.bf16.msra.mxu0 0
      %1562 = vmatprep.subr.bf16.mxu0 0
      %1563 = vmatpush1.bf16.msra.mxu0 0
      %1564 = vmatprep.subr.bf16.mxu0 0
      %1565 = vmatpush1.bf16.msra.mxu0 0
      %1566 = vmatprep.subr.bf16.mxu0 0
      %1567 = vmatpush1.bf16.msra.mxu0 0
      %1568 = vmatprep.subr.bf16.mxu0 0
      %1569 = vmatpush1.bf16.msra.mxu0 0
      %1570 = vmatprep.subr.bf16.mxu0 0
      %1571 = vmatpush1.bf16.msra.mxu0 0
      %1572 = vmatprep.mubr.bf16.mxu0 0
      %1573 = vmatmul.mubr.bf16.gmra.mrb[0].mxu0 %v1538
      %v1574 = vpop.f32.mrb[0].mxu0
      %v1575 = vadd.f32 0.0, %v1574
      %v1576 = vpop.f32.mrb[0].mxu0
      %v1577 = vpop.f32.mrb[0].mxu0
      %v1578 = vadd.f32 0.0, %v1577
      %v1579 = vpop.f32.mrb[0].mxu0
      %1580 = vdwg.mxu0
      %v1581 = vadd.f32 %v1518, %v1575
      %v1582 = vadd.f32 %v1521, %v1578
      %v1583 = vld [vmem:[%s929] sm:$0xf]
      %v1584 = vld [vmem:[%s929 + $0x4] sm:$0xf]
      %v1585 = vrot.slane %v1414, 1
      %v1586 = vrot.slane %v1416, 2
      %v1587 = vor.u32 %v1585, %v1586
      %v1588 = vshrl.u32 %v1408, 16
      %v1590 = vrot.slane %v1588, 1
      %v1591 = vrot.slane %v1421, 2
      %v1592 = vor.u32 %v1590, %v1591
      %v1593 = vsel %vm932, %v1587, %v1592
      %v1596 = vunpack.c.l.b16 %v1583
      %v1597 = vunpack.c.l.b16 %v1584
      %v1598 = vpack.c.b16 %v1597, %v1596
      %v1601 = vsel %vm774, %v1593, 0
      %1603 = vmatprep.subr.bf16.mxu0 0
      %1604 = vmatpush1.bf16.msra.mxu0 %v1598
      %1605 = vmatprep.subr.bf16.mxu0 0
      %1606 = vmatpush1.bf16.msra.mxu0 0
      %1607 = vmatprep.subr.bf16.mxu0 0
      %1608 = vmatpush1.bf16.msra.mxu0 0
      %1609 = vmatprep.subr.bf16.mxu0 0
      %1610 = vmatpush1.bf16.msra.mxu0 0
      %1611 = vmatprep.subr.bf16.mxu0 0
      %1612 = vmatpush1.bf16.msra.mxu0 0
      %1613 = vmatprep.subr.bf16.mxu0 0
      %1614 = vmatpush1.bf16.msra.mxu0 0
      %1615 = vmatprep.subr.bf16.mxu0 0
      %1616 = vmatpush1.bf16.msra.mxu0 0
      %1617 = vmatprep.subr.bf16.mxu0 0
      %1618 = vmatpush1.bf16.msra.mxu0 0
      %1619 = vmatprep.subr.bf16.mxu0 0
      %1620 = vmatpush1.bf16.msra.mxu0 0
      %1621 = vmatprep.subr.bf16.mxu0 0
      %1622 = vmatpush1.bf16.msra.mxu0 0
      %1623 = vmatprep.subr.bf16.mxu0 0
      %1624 = vmatpush1.bf16.msra.mxu0 0
      %1625 = vmatprep.subr.bf16.mxu0 0
      %1626 = vmatpush1.bf16.msra.mxu0 0
      %1627 = vmatprep.subr.bf16.mxu0 0
      %1628 = vmatpush1.bf16.msra.mxu0 0
      %1629 = vmatprep.subr.bf16.mxu0 0
      %1630 = vmatpush1.bf16.msra.mxu0 0
      %1631 = vmatprep.subr.bf16.mxu0 0
      %1632 = vmatpush1.bf16.msra.mxu0 0
      %1633 = vmatprep.subr.bf16.mxu0 0
      %1634 = vmatpush1.bf16.msra.mxu0 0
      %1635 = vmatprep.mubr.bf16.mxu0 0
      %1636 = vmatmul.mubr.bf16.gmra.mrb[0].mxu0 %v1601
      %v1637 = vpop.f32.mrb[0].mxu0
      %v1638 = vadd.f32 0.0, %v1637
      %v1639 = vpop.f32.mrb[0].mxu0
      %v1640 = vpop.f32.mrb[0].mxu0
      %v1641 = vadd.f32 0.0, %v1640
      %v1642 = vpop.f32.mrb[0].mxu0
      %1643 = vdwg.mxu0
      %v1644 = vadd.f32 %v1581, %v1638
      %v1645 = vadd.f32 %v1582, %v1641
      %v1646 = vld [vmem:[%s8] sm:$0x1]
      %v1648 = vlaneseq
      %v1649 = vshrl.u32 %v1648, 7
      %v1650 = vsub.s32 0, %v1649
      %v1651 = vrot.slane %v1646, %v1650
      %v1653 = vadd.f32 %v1644, %v1651
      %v1654 = vadd.f32 %v1645, %v1651
      %s1655 = scalar_lea.vmem %s336, 16
      %1656 = vst.msk [vmem:[%s1655] sm:$0xff] %vm689, %v1653
      %1657 = vst.msk [vmem:[%s1655 + $0x8] sm:$0xff] %vm689, %v1654
      %s1658 = smul.u32 2, %s20
      %p1659 = scmp.lt.s32.totalorder %s1658, 3
      %s1660 = scalar_select %p1659, %s1658, 3
      %s1661 = smul.addr %s1660, 2
      %s1662 = smul.addr %s1661, 8
      %s1663 = scalar_lea.vmem %s9, %s1662
      // Predicated region
      $region57: #{tpu_custom_call.1} parent=55 // pred_check
        %p1664 = pneg %p232
      $region58: #{tpu_custom_call.1} parent=55 // pred_check_branch
        %1666 = sbr.rel (%p1664) target = $region60
      $region59: #{tpu_custom_call.1} parent=55 // pred_region
        %s1667 = smul.u32 2, %s20
      $region60: #{tpu_custom_call.1} parent=55 // pred_fallthru
        _
    $region56: #{tpu_custom_call.1} parent=5 // pred_fallthru
      _
    %p1668 = scmp.le.s32.totalorder 2, %s15
    // Predicated region
    $region61: #{tpu_custom_call.1} parent=5 // pred_check
      %p1669 = pneg %p1668
    $region62: #{tpu_custom_call.1} parent=5 // pred_check_branch
      %1671 = sbr.rel (%p1669) target = $region64
    $region63: #{tpu_custom_call.1} parent=5 // pred_region
      %s1672 = ssub.s32 %s15, 2
      // Predicated region
      $region65: #{tpu_custom_call.1} parent=63 // pred_check
        %p1673 = pneg %p238
      $region66: #{tpu_custom_call.1} parent=63 // pred_check_branch
        %1675 = sbr.rel (%p1673) target = $region68
      $region67: #{tpu_custom_call.1} parent=63 // pred_region
        %s1676 = smul.u32 2, %s21
        %p1677 = scmp.lt.s32.totalorder %s1676, 3
        %s1678 = scalar_select %p1677, %s1676, 3
        %s1679 = smul.addr %s1678, 2
        %s1680 = smul.addr %s1679, 8
        %s1681 = scalar_lea.vmem %s9, %s1680
      $region68: #{tpu_custom_call.1} parent=63 // pred_fallthru
        _
    $region64: #{tpu_custom_call.1} parent=5 // pred_fallthru
      _
  $region6: #{tpu_custom_call.1} parent=0 // loop_footer
    %s19 = sadd.s32 1, %s15
  $region7: #{tpu_custom_call.1} parent=0 // loop_footer_branch
    %14 = sbr.rel target = $region3
  $region8: #{tpu_custom_call.1} parent=0 // loop_exit
    _

</llo_original>
